<compile_context>
chip_gen: v6e
topology: v6e:2x2x1
jax: 0.10.0
libtpu: 0.0.40
codegen_flags: <defaults>
</compile_context>

<pallas_src>
import math

import jax
import jax.numpy as jnp
from jax.experimental import pallas as pl
from jax.experimental.pallas import tpu as pltpu


# ---------------------------------------------------------------------------
# Kernel: one (B, tn) output column block, accumulated over the K grid axis.
# ---------------------------------------------------------------------------
def _stitch_matmul_kernel(x_ref, w_ref, o_ref, acc_ref):
    @pl.when(pl.program_id(1) == 0)
    def _init():
        acc_ref[...] = jnp.zeros_like(acc_ref)

    # Upcast in-register so the weight may be streamed from HBM in bf16
    # (halves the DMA bytes of this bandwidth-bound kernel) while the
    # accumulation stays f32.  For f32 weights the casts are no-ops.
    acc_ref[...] += jnp.dot(
        x_ref[...].astype(jnp.float32),
        w_ref[...].astype(jnp.float32),
        preferred_element_type=jnp.float32,
    )

    @pl.when(pl.program_id(1) == pl.num_programs(1) - 1)
    def _finalize():
        o_ref[...] = acc_ref[...].astype(o_ref.dtype)


# ---------------------------------------------------------------------------
# Tiling helpers
# ---------------------------------------------------------------------------
def _round_up(v, m):
    return ((v + m - 1) // m) * m


def _largest_tile(total, target, unit=128):
    """Largest multiple of `unit` dividing `total` that is <= max(target, unit)."""
    target = max(target, unit)
    best = unit
    d = unit
    while d <= total:
        if total % d == 0 and d <= target:
            best = d
        d += unit
    return best


def _chip_kind():
    try:
        return (jax.devices()[0].device_kind or "").lower()
    except Exception:
        return ""


def _choose_tiles(B, Kp, Np, requested_tn, w_itemsize):
    kind = _chip_kind()
    # v7x: 2 TensorCores per chip -> keep >= 2 "parallel" N steps so both
    # cores stream half the weight.  v5e / v6e (1 TC): fewest steps possible
    # (~0.35 us fixed overhead per grid step, pipelining buys nothing at B=2).
    # Unknown chips default to 2 steps (near-optimal everywhere, never idles
    # a core).
    single_core = ("lite" in kind) or ("v5e" in kind) or ("v6e" in kind)
    min_grid_n = 1 if single_core else 2
    # Per-buffer cap for the streamed weight block: v7x has 64 MiB physical
    # VMEM (32 MiB scoped default) vs 128 MiB on v5e/v6e.
    per_buf_cap = (8 << 20) if "v7" in kind else (16 << 20)

    # ---- N (lane) tile: multiple of 128 that divides Np ----
    if requested_tn is None:
        tn = _largest_tile(Np, Np // min_grid_n)
    else:
        tn = _largest_tile(Np, requested_tn)   # sanitize user value
    while Np // tn < min_grid_n and tn > 128:
        tn = _largest_tile(Np, tn // 2)

    # ---- K (reduction) tile: full K unless the weight block busts the budget ----
    tk = Kp
    while tk * tn * w_itemsize > per_buf_cap:
        if tk > 512:
            tk = _largest_tile(Kp, tk // 2)
        elif tn > 128:
            tn = _largest_tile(Np, tn // 2)
        else:
            break

    # Rough VMEM footprint (double-buffered pipeline buffers + accumulator).
    est = (2 * B * tk * 4
           + 2 * tk * tn * w_itemsize
           + 2 * B * tn * 4
           + B * tn * 4)
    vmem_limit = None
    if est > (16 << 20):  # conservative scoped-VMEM default (v5e)
        cap = (48 << 20) if "v7" in kind else (112 << 20)
        vmem_limit = min(int(est * 5 // 4) + (2 << 20), cap)
    return tn, tk, vmem_limit


# ---------------------------------------------------------------------------
# Wrapper
# ---------------------------------------------------------------------------
def stitch_forward(x, weight, *, tn=None, weight_stream_dtype=None):
    """y = reshape((reshape(x, (B, -1)) @ weight)[:, :F], x.shape).

    weight_stream_dtype: optional narrower storage dtype (e.g. jnp.bfloat16)
      for the streamed weight -- roughly halves wall time of this
      bandwidth-bound kernel; exact for the module's identity init, but
      rounds arbitrary trained weights.  Default (None) keeps f32 to match
      the PyTorch module's numerics.
    """
    orig_shape = x.shape
    B = x.shape[0]
    F = math.prod(x.shape[1:])
    K, N = weight.shape
    assert K == F, (K, F)

    stream_dtype = jnp.dtype(weight_stream_dtype) if weight_stream_dtype else jnp.dtype(jnp.float32)
    xf = x.reshape(B, F).astype(jnp.float32)
    w = weight.astype(stream_dtype)

    # Pad lane dims to multiples of 128 only if needed (no-op when F % 128 == 0,
    # which holds for the shapes below -> zero extra HBM copies).
    Kp = _round_up(K, 128)
    Np = _round_up(N, 128)
    if Kp != K or Np != N:
        w = jnp.pad(w, ((0, Kp - K), (0, Np - N)))
    if Kp != K:
        xf = jnp.pad(xf, ((0, 0), (0, Kp - K)))

    tn, tk, vmem_limit = _choose_tiles(B, Kp, Np, tn, stream_dtype.itemsize)

    cp_kwargs = dict(dimension_semantics=("parallel", "arbitrary"))
    if vmem_limit is not None:
        cp_kwargs["vmem_limit_bytes"] = vmem_limit

    # NOTE: MXU matmul at default precision may decompose f32 into bf16 passes;
    # results match XLA's GEMM to well within 1e-3 (and the identity-weight
    # init reproduces the input to <1e-5).
    # TODO(synk): add an M (batch-row) grid axis once B is nontrivial so the
    # MXU M dimension can be filled; at B=2 the kernel is purely DMA-bound.
    out = pl.pallas_call(
        _stitch_matmul_kernel,
        grid=(Np // tn, Kp // tk),
        in_specs=[
            pl.BlockSpec((B, tk), lambda j, k: (0, k)),    # LHS (tiny, rides along)
            pl.BlockSpec((tk, tn), lambda j, k: (k, j)),   # weight block, lane-dense
        ],
        out_specs=pl.BlockSpec((B, tn), lambda j, k: (0, j)),
        out_shape=jax.ShapeDtypeStruct((B, Np), jnp.float32),
        scratch_shapes=[pltpu.VMEM((B, tn), jnp.float32)],
        compiler_params=pltpu.CompilerParams(**cp_kwargs),
    )(xf, w)

    # Matches `output[:, :input1_reshaped.size(1)].view(input1_shape)`
    # (a no-op slice for the module's square, unpadded weight).
    return out[:, :F].reshape(orig_shape)


# ---------------------------------------------------------------------------

if __name__ == "__main__":
    # Small shapes consistent with the module: batch=2, channels=4, spatial=16.
    B, C, H, W = 2, 4, 16, 16
    input_size = C * H * W          # 1024 = flattened feature size

    key = jax.random.PRNGKey(0)
    kx, kw = jax.random.split(key)
    x = jax.random.normal(kx, (B, C, H, W), jnp.float32)

    # nn.Parameter(torch.eye(input_size)) — identity init, trainable in torch.
    weight = jnp.eye(input_size, dtype=jnp.float32)

    fwd = jax.jit(stitch_forward)
    out = fwd(x, weight)
    jax.block_until_ready(out)

    assert out.shape == x.shape, (out.shape, x.shape)
    # Identity-initialized weight => forward pass is (numerically) the identity.
    assert bool(jnp.allclose(out, x, atol=1e-5, rtol=1e-5))
    assert bool(jnp.all(jnp.isfinite(out)))

    # Cross-check against XLA's GEMM with a non-identity weight (loose
    # tolerance: MXU default-precision pass count may differ between paths).
    w_rand = 0.05 * jax.random.normal(kw, (input_size, input_size), jnp.float32)
    out_r = fwd(x, w_rand)
    ref_r = (x.reshape(B, -1) @ w_rand).reshape(x.shape)
    jax.block_until_ready(out_r)
    assert bool(jnp.allclose(out_r, ref_r, atol=5e-2, rtol=1e-2))

    print("KERNEL_OK")
</pallas_src>

<mosaic_0001>
module attributes {stable_mosaic.version = 11 : i64} {
  func.func @_stitch_matmul_kernel(%arg0: i32, %arg1: i32, %arg2: memref<2x1024xf32, #tpu.memory_space<vmem>>, %arg3: memref<1024x512xf32, #tpu.memory_space<vmem>>, %arg4: memref<2x512xf32, #tpu.memory_space<vmem>>, %arg5: memref<2x512xf32, #tpu.memory_space<vmem>>) attributes {dimension_semantics = [#tpu.dimension_semantics<parallel>, #tpu.dimension_semantics<arbitrary>], iteration_bounds = array<i64: 2, 1>, scalar_prefetch = 0 : i64, scratch_operands = 1 : i64, tpu.core_type = #tpu.core_type<tc>, window_params = [{transform_indices = @transform_0, window_bounds = array<i64: 2, 1024>}, {transform_indices = @transform_1, window_bounds = array<i64: 1024, 512>}, {transform_indices = @transform_2, window_bounds = array<i64: 2, 512>}]} {
    %c0_i32 = arith.constant 0 : i32
    %0 = arith.cmpi eq, %arg1, %c0_i32 : i32
    %1 = arith.extui %0 : i1 to i32
    %c0_i32_0 = arith.constant 0 : i32
    %2 = arith.cmpi ne, %1, %c0_i32_0 : i32
    scf.if %2 {
      %cst_10 = arith.constant 0.000000e+00 : f32
      %12 = vector.broadcast %cst_10 : f32 to vector<2x512xf32>
      %c0_11 = arith.constant 0 : index
      %c0_12 = arith.constant 0 : index
      %13 = vector.load %arg5[%c0_11, %c0_12] : memref<2x512xf32, #tpu.memory_space<vmem>>, vector<2x512xf32>
      tpu.vector_store %arg5[%c0_11, %c0_12], %12 {strides = array<i32>} : memref<2x512xf32, #tpu.memory_space<vmem>>, vector<2x512xf32>,
    } else {
    }
    %c0 = arith.constant 0 : index
    %c0_1 = arith.constant 0 : index
    %3 = vector.load %arg5[%c0, %c0_1] : memref<2x512xf32, #tpu.memory_space<vmem>>, vector<2x512xf32>
    %c0_2 = arith.constant 0 : index
    %c0_3 = arith.constant 0 : index
    %4 = vector.load %arg2[%c0_2, %c0_3] : memref<2x1024xf32, #tpu.memory_space<vmem>>, vector<2x1024xf32>
    %c0_4 = arith.constant 0 : index
    %c0_5 = arith.constant 0 : index
    %5 = vector.load %arg3[%c0_4, %c0_5] : memref<1024x512xf32, #tpu.memory_space<vmem>>, vector<1024x512xf32>
    %cst = arith.constant dense<0.000000e+00> : vector<2x512xf32>
    %6 = tpu.matmul %4, %5, %cst {dimension_numbers = #tpu.dot_dimension_numbers<[1], [0], [0], [1], [0, 0, 1, 1], [], []>} : vector<2x1024xf32>, vector<1024x512xf32>, vector<2x512xf32> -> vector<2x512xf32>
    %7 = arith.addf %3, %6 : vector<2x512xf32>
    %c0_6 = arith.constant 0 : index
    %c0_7 = arith.constant 0 : index
    %8 = vector.load %arg5[%c0_6, %c0_7] : memref<2x512xf32, #tpu.memory_space<vmem>>, vector<2x512xf32>
    tpu.vector_store %arg5[%c0_6, %c0_7], %7 {strides = array<i32>} : memref<2x512xf32, #tpu.memory_space<vmem>>, vector<2x512xf32>,
    %c0_i32_8 = arith.constant 0 : i32
    %9 = arith.cmpi eq, %arg1, %c0_i32_8 : i32
    %10 = arith.extui %9 : i1 to i32
    %c0_i32_9 = arith.constant 0 : i32
    %11 = arith.cmpi ne, %10, %c0_i32_9 : i32
    scf.if %11 {
      %c0_10 = arith.constant 0 : index
      %c0_11 = arith.constant 0 : index
      %12 = vector.load %arg5[%c0_10, %c0_11] : memref<2x512xf32, #tpu.memory_space<vmem>>, vector<2x512xf32>
      %c0_12 = arith.constant 0 : index
      %c0_13 = arith.constant 0 : index
      %13 = vector.load %arg4[%c0_12, %c0_13] : memref<2x512xf32, #tpu.memory_space<vmem>>, vector<2x512xf32>
      tpu.vector_store %arg4[%c0_12, %c0_13], %12 {strides = array<i32>} : memref<2x512xf32, #tpu.memory_space<vmem>>, vector<2x512xf32>,
    } else {
    }
    return
  }
  func.func @transform_0(%arg0: i32, %arg1: i32) -> (i32, i32) {
    %c0_i32 = arith.constant 0 : i32
    %c0_i32_0 = arith.constant 0 : i32
    return %c0_i32, %arg1 : i32, i32
  }
  func.func @transform_1(%arg0: i32, %arg1: i32) -> (i32, i32) {
    %c0_i32 = arith.constant 0 : i32
    return %arg1, %arg0 : i32, i32
  }
  func.func @transform_2(%arg0: i32, %arg1: i32) -> (i32, i32) {
    %c0_i32 = arith.constant 0 : i32
    %c0_i32_0 = arith.constant 0 : i32
    return %c0_i32, %arg0 : i32, i32
  }
}

</mosaic_0001>

<llo_original>
// kernel: stitch_forward.1
$region0: #{stitch_forward.1}
  #allocation0 [shape = 'u32[]', space=smem, size = 0x4, offset = 0x4, fixed_abs, tag = 'smem constant byte address 0x4 - core index']
  #allocation1 [shape = 'u32[144,128]{1,0:T(1,128)}', space=vmem, size = 0x12000, scoped, tag = 'internal scratch']
  #allocation2 [shape = 'f32[2,512]{1,0:T(2,128)}', space=vmem, size = 0x1000, scoped, tag = 'scratch operand']
  %s0 = inlined_call_operand.vmem [shape: f32[2,1024], index: 0, kind: input, shape index: {}]
  %s1 = inlined_call_operand.hbm [shape: f32[1024,1024], index: 1, kind: input, shape index: {}]
  %s2 = inlined_call_operand.vmem [shape: f32[2,1024], index: 2, kind: output, shape index: {}]
  %s3 = sld [smem:[#allocation0]]
  $region53: #{stitch_forward.1} parent=0
    _
  %s5 = ssub.s32 1, %s3
  %s6 = scalar_select 0, %s5, %s3
  $region1: #{stitch_forward.1} parent=0
    #allocation3 [shape = 'u8[4194304]{0}', space=vmem, size = 0x400000, scoped, tag = 'input window, operand 1']
    #allocation4 [shape = 's32[2]{0}', space=sflag, size = 0x8, scoped, tag = 'scoped memory for stitch_forward.1']
    %7 = vsyncpa [#allocation4], 0
    %s8 = scalar_lea.sflag [#allocation4], 1
    %9 = vsyncpa %s8, 0
    loop: start=0, step=1, limit=4
    $region2: #{stitch_forward.1} parent=1 // loop_pre_header
      _
    $region3: #{stitch_forward.1} parent=1 // loop_header
      %s11 = sphi 0, %s15
      %p12 = scmp.ge.s32.totalorder %s11, 4
      %s18 = sphi 0, %s30
      %s19 = sphi 0, %s26
      %s20 = sphi 0, %s18
      %s21 = sphi 0, %s19
      %s22 = sphi 0, %s20
      %s23 = sphi 0, %s21
      %s33 = sphi 0, %s35
      %s36 = sphi 0, %s33
      %s37 = sphi 0, %s36
      %s53 = sphi 0, %s37
      %s61 = sphi 0, %s63
      %s64 = sphi 0, %s61
      %s65 = sphi 0, %s64
      %s81 = sphi 0, %s65
      %s87 = sphi 0, %s89
      %s90 = sphi 0, %s87
      %s91 = sphi 0, %s90
      %s107 = sphi 0, %s91
    $region4: #{stitch_forward.1} parent=1 // loop_header_branch
      %14 = sbr.rel (%p12) target = $region8
    $region5: #{stitch_forward.1} parent=1 // loop_body
      %s16 = ssub.s32 %s11, 1
      %s17 = ssub.s32 %s11, 2
      %s24 = sadd.s32 1, %s19
      %p25 = scmp.ge.s32.totalorder %s24, 1
      %s26 = scalar_select %p25, 0, %s24
      %s27 = sadd.s32 1, %s18
      %s28 = scalar_select %p25, %s27, %s18
      %p29 = scmp.ge.s32.totalorder %s28, 2
      %s30 = scalar_select %p29, 0, %s28
      %s31 = ssub.s32 %s19, %s26
      %p32 = scmp.eq.s32.totalorder %s31, 0
      %s34 = sadd.s32 %s33, 1
      %s35 = scalar_select %p32, %s33, %s34
      %p38 = pneg %p32
      %p39 = scmp.eq.s32.totalorder %s11, 1
      %p40 = por %p38, %p39
      %p41 = scmp.ne.s32.totalorder %s33, %s36
      %p42 = scmp.eq.s32.totalorder %s11, 0
      %p43 = por %p41, %p42
      %p44 = scmp.ne.s32.totalorder %s33, %s36
      %p45 = scmp.eq.s32.totalorder %s16, 1
      %p46 = por %p44, %p45
      %p47 = scmp.ne.s32.totalorder %s36, %s37
      %p48 = scmp.eq.s32.totalorder %s16, 0
      %p49 = por %p47, %p48
      %p50 = scmp.ne.s32.totalorder %s36, %s37
      %p51 = scmp.eq.s32.totalorder %s17, 1
      %p52 = por %p50, %p51
      %p54 = scmp.ne.s32.totalorder %s37, %s53
      %p55 = scmp.eq.s32.totalorder %s17, 0
      %p56 = por %p54, %p55
      %s57 = ssub.s32 %s19, %s26
      %s58 = ssub.s32 %s18, %s30
      %s59 = sor.u32 %s57, %s58
      %p60 = scmp.eq.s32.totalorder %s59, 0
      %s62 = sadd.s32 %s61, 1
      %s63 = scalar_select %p60, %s61, %s62
      %p66 = pneg %p60
      %p67 = scmp.eq.s32.totalorder %s11, 1
      %p68 = por %p66, %p67
      %p69 = scmp.ne.s32.totalorder %s61, %s64
      %p70 = scmp.eq.s32.totalorder %s11, 0
      %p71 = por %p69, %p70
      %p72 = scmp.ne.s32.totalorder %s61, %s64
      %p73 = scmp.eq.s32.totalorder %s16, 1
      %p74 = por %p72, %p73
      %p75 = scmp.ne.s32.totalorder %s64, %s65
      %p76 = scmp.eq.s32.totalorder %s16, 0
      %p77 = por %p75, %p76
      %p78 = scmp.ne.s32.totalorder %s64, %s65
      %p79 = scmp.eq.s32.totalorder %s17, 1
      %p80 = por %p78, %p79
      %p82 = scmp.ne.s32.totalorder %s65, %s81
      %p83 = scmp.eq.s32.totalorder %s17, 0
      %p84 = por %p82, %p83
      %s85 = ssub.s32 %s18, %s30
      %p86 = scmp.eq.s32.totalorder %s85, 0
      %s88 = sadd.s32 %s87, 1
      %s89 = scalar_select %p86, %s87, %s88
      %p92 = pneg %p86
      %p93 = scmp.eq.s32.totalorder %s11, 1
      %p94 = por %p92, %p93
      %p95 = scmp.ne.s32.totalorder %s87, %s90
      %p96 = scmp.eq.s32.totalorder %s11, 0
      %p97 = por %p95, %p96
      %p98 = scmp.ne.s32.totalorder %s87, %s90
      %p99 = scmp.eq.s32.totalorder %s16, 1
      %p100 = por %p98, %p99
      %p101 = scmp.ne.s32.totalorder %s90, %s91
      %p102 = scmp.eq.s32.totalorder %s16, 0
      %p103 = por %p101, %p102
      %p104 = scmp.ne.s32.totalorder %s90, %s91
      %p105 = scmp.eq.s32.totalorder %s17, 1
      %p106 = por %p104, %p105
      %p108 = scmp.ne.s32.totalorder %s91, %s107
      %p109 = scmp.eq.s32.totalorder %s17, 0
      %p110 = por %p108, %p109
      %p111 = scmp.le.s32.totalorder 1, %s11
      %p112 = scmp.lt.s32.totalorder %s11, 3
      %p113 = pnand %p111, %p112
      %p114 = pneg %p113
      // Predicated region
      $region9: #{stitch_forward.1} parent=5 // pred_check
        _
      $region10: #{stitch_forward.1} parent=5 // pred_check_branch
        %116 = sbr.rel (%p113) target = $region12
      $region11: #{stitch_forward.1} parent=5 // pred_region
        %s117 = ssub.s32 %s11, 1
        // Predicated region
        $region13: #{stitch_forward.1} parent=11 // pred_check
          %p118 = pneg %p49
        $region14: #{stitch_forward.1} parent=11 // pred_check_branch
          %120 = sbr.rel (%p118) target = $region16
        $region15: #{stitch_forward.1} parent=11 // pred_region
          %s121 = smul.u32 8, %s21
          %p122 = scmp.lt.s32.totalorder %s121, 7
          %s123 = scalar_select %p122, %s121, 7
          %s124 = smul.addr %s123, 2
          %s125 = scalar_lea.vmem %s0, %s124
          %s126 = smul.u32 8, %s21
        $region16: #{stitch_forward.1} parent=11 // pred_fallthru
          _
      $region12: #{stitch_forward.1} parent=5 // pred_fallthru
        _
      %p127 = scmp.lt.s32.totalorder %s11, 2
      // Predicated region
      $region17: #{stitch_forward.1} parent=5 // pred_check
        %p128 = pneg %p127
      $region18: #{stitch_forward.1} parent=5 // pred_check_branch
        %130 = sbr.rel (%p128) target = $region20
      $region19: #{stitch_forward.1} parent=5 // pred_region
        // Predicated region
        $region21: #{stitch_forward.1} parent=19 // pred_check
          %p131 = pneg %p71
        $region22: #{stitch_forward.1} parent=19 // pred_check_branch
          %133 = sbr.rel (%p131) target = $region24
        $region23: #{stitch_forward.1} parent=19 // pred_region
          %s134 = sand.u32 %s61, 1
          %s135 = scalar_lea.sflag [#allocation4], %s134
          %s136 = sand.u32 %s61, 1
          %s137 = smul.addr %s136, 4096
          %s138 = scalar_lea.vmem [#allocation3], %s137
          %s139 = smul.u32 128, %s19
          %s140 = smul.u32 4, %s18
          %s142 = ssub.s32 65536, 65536
          %143 = vsyncadd %s135, %s142
          %s144 = smul.addr %s139, 8
          %s145 = sadd.s32 %s140, %s144
          %s146 = smul.addr %s145, 128
          %s147 = scalar_lea.hbm %s1, %s146
          %s148 = sshll.u32 %s138, 4
          %s149 = int_to_ptr.vmem [resolvable:$true] %s148
          %154 = dma.hbm_to_vmem [thread:$0]  %s147, 65536, %s149, %s135, 1024, 512, 32
        $region24: #{stitch_forward.1} parent=19 // pred_fallthru
          _
      $region20: #{stitch_forward.1} parent=5 // pred_fallthru
        _
      %p155 = scmp.le.s32.totalorder 1, %s11
      %p156 = scmp.lt.s32.totalorder %s11, 3
      %p157 = pnand %p155, %p156
      %p158 = pneg %p157
      // Predicated region
      $region25: #{stitch_forward.1} parent=5 // pred_check
        _
      $region26: #{stitch_forward.1} parent=5 // pred_check_branch
        %160 = sbr.rel (%p157) target = $region28
      $region27: #{stitch_forward.1} parent=5 // pred_region
        %s161 = ssub.s32 %s11, 1
        %s162 = sand.u32 %s64, 1
        %s163 = scalar_lea.sflag [#allocation4], %s162
        %s164 = sand.u32 %s64, 1
        %s165 = smul.addr %s164, 4096
        %s166 = scalar_lea.vmem [#allocation3], %s165
        // Predicated region
        $region29: #{stitch_forward.1} parent=27 // pred_check
          %p167 = pneg %p77
        $region30: #{stitch_forward.1} parent=27 // pred_check_branch
          %169 = sbr.rel (%p167) target = $region32
        $region31: #{stitch_forward.1} parent=27 // pred_region
          %170 = dma.done %s163, 65536
        $region32: #{stitch_forward.1} parent=27 // pred_fallthru
          _
        %s171 = smul.u32 8, %s21
        %p172 = scmp.lt.s32.totalorder %s171, 7
        %s173 = scalar_select %p172, %s171, 7
        %s174 = smul.addr %s173, 2
        %s175 = scalar_lea.vmem %s0, %s174
        %p176 = pneg %p49
        %p177 = pneg %p46
        %s178 = sand.u32 %s64, 1
        %s179 = scalar_lea.sflag [#allocation4], %s178
        %s180 = sand.u32 %s64, 1
        %s181 = smul.addr %s180, 4096
        %s182 = scalar_lea.vmem [#allocation3], %s181
        %p183 = pneg %p77
        %p184 = pneg %p74
        %p185 = pneg %p103
        %p186 = pneg %p100
        %s187 = smul.u32 4, %s20
        %p188 = scmp.lt.s32.totalorder %s187, 7
        %s189 = scalar_select %p188, %s187, 7
        %s190 = smul.addr %s189, 2
        %s191 = scalar_lea.vmem %s2, %s190
        %s192 = smul.u32 8, %s21
        %p193 = scmp.lt.s32.totalorder %s192, 7
        %s194 = scalar_select %p193, %s192, 7
        %s195 = smul.addr %s194, 2
        %s196 = scalar_lea.vmem %s0, %s195
        %s197 = smul.u32 8, %s21
        %s198 = smul.u32 128, %s21
        %s199 = smul.u32 4, %s20
        %s200 = smul.u32 4, %s20
        %p201 = scmp.lt.s32.totalorder %s200, 7
        %s202 = scalar_select %p201, %s200, 7
        %s203 = smul.addr %s202, 2
        %s204 = scalar_lea.vmem %s2, %s203
        %s205 = smul.u32 4, %s20
        %p206 = scmp.eq.s32.totalorder %s21, 0
        // Predicated region
        $region33: #{stitch_forward.1} parent=27 // pred_check
          %p207 = pneg %p206
        $region34: #{stitch_forward.1} parent=27 // pred_check_branch
          %209 = sbr.rel (%p207) target = $region36
        $region35: #{stitch_forward.1} parent=27 // pred_region
          %210 = vst [vmem:[#allocation2] sm:$0xff] 0.0
        $region36: #{stitch_forward.1} parent=27 // pred_fallthru
          _
        %v211 = vld [vmem:[#allocation2] sm:$0xff]
        %v212 = vld [vmem:[%s196] sm:$0xff]
        %v213 = vld [vmem:[%s196 + $0x8] sm:$0xff]
        %v214 = vld [vmem:[%s166] sm:$0xff]
        %v215 = vld [vmem:[%s166 + $0x8] sm:$0xff]
        %v216 = vld [vmem:[%s166 + $0x10] sm:$0xff]
        %v217 = vld [vmem:[%s166 + $0x18] sm:$0xff]
        %v218 = vld [vmem:[%s166 + $0x20] sm:$0xff]
        %v219 = vld [vmem:[%s166 + $0x28] sm:$0xff]
        %v220 = vld [vmem:[%s166 + $0x30] sm:$0xff]
        %v221 = vld [vmem:[%s166 + $0x38] sm:$0xff]
        %v222 = vld [vmem:[%s166 + $0x40] sm:$0xff]
        %v223 = vld [vmem:[%s166 + $0x48] sm:$0xff]
        %v224 = vld [vmem:[%s166 + $0x50] sm:$0xff]
        %v225 = vld [vmem:[%s166 + $0x58] sm:$0xff]
        %v226 = vld [vmem:[%s166 + $0x60] sm:$0xff]
        %v227 = vld [vmem:[%s166 + $0x68] sm:$0xff]
        %v228 = vld [vmem:[%s166 + $0x70] sm:$0xff]
        %v229 = vld [vmem:[%s166 + $0x78] sm:$0xff]
        %v230 = vld [vmem:[%s166 + $0x80] sm:$0xff]
        %v231 = vld [vmem:[%s166 + $0x88] sm:$0xff]
        %v232 = vld [vmem:[%s166 + $0x90] sm:$0xff]
        %v233 = vld [vmem:[%s166 + $0x98] sm:$0xff]
        %v234 = vld [vmem:[%s166 + $0xa0] sm:$0xff]
        %v235 = vld [vmem:[%s166 + $0xa8] sm:$0xff]
        %v236 = vld [vmem:[%s166 + $0xb0] sm:$0xff]
        %v237 = vld [vmem:[%s166 + $0xb8] sm:$0xff]
        %v238 = vld [vmem:[%s166 + $0xc0] sm:$0xff]
        %v239 = vld [vmem:[%s166 + $0xc8] sm:$0xff]
        %v240 = vld [vmem:[%s166 + $0xd0] sm:$0xff]
        %v241 = vld [vmem:[%s166 + $0xd8] sm:$0xff]
        %v242 = vld [vmem:[%s166 + $0xe0] sm:$0xff]
        %v243 = vld [vmem:[%s166 + $0xe8] sm:$0xff]
        %v244 = vld [vmem:[%s166 + $0xf0] sm:$0xff]
        %v245 = vld [vmem:[%s166 + $0xf8] sm:$0xff]
        %v246 = vld [vmem:[%s166 + $0x100] sm:$0xff]
        %v247 = vld [vmem:[%s166 + $0x108] sm:$0xff]
        %v248 = vld [vmem:[%s166 + $0x110] sm:$0xff]
        %v249 = vld [vmem:[%s166 + $0x118] sm:$0xff]
        %v250 = vld [vmem:[%s166 + $0x120] sm:$0xff]
        %v251 = vld [vmem:[%s166 + $0x128] sm:$0xff]
        %v252 = vld [vmem:[%s166 + $0x130] sm:$0xff]
        %v253 = vld [vmem:[%s166 + $0x138] sm:$0xff]
        %v254 = vld [vmem:[%s166 + $0x140] sm:$0xff]
        %v255 = vld [vmem:[%s166 + $0x148] sm:$0xff]
        %v256 = vld [vmem:[%s166 + $0x150] sm:$0xff]
        %v257 = vld [vmem:[%s166 + $0x158] sm:$0xff]
        %v258 = vld [vmem:[%s166 + $0x160] sm:$0xff]
        %v259 = vld [vmem:[%s166 + $0x168] sm:$0xff]
        %v260 = vld [vmem:[%s166 + $0x170] sm:$0xff]
        %v261 = vld [vmem:[%s166 + $0x178] sm:$0xff]
        %v262 = vld [vmem:[%s166 + $0x180] sm:$0xff]
        %v263 = vld [vmem:[%s166 + $0x188] sm:$0xff]
        %v264 = vld [vmem:[%s166 + $0x190] sm:$0xff]
        %v265 = vld [vmem:[%s166 + $0x198] sm:$0xff]
        %v266 = vld [vmem:[%s166 + $0x1a0] sm:$0xff]
        %v267 = vld [vmem:[%s166 + $0x1a8] sm:$0xff]
        %v268 = vld [vmem:[%s166 + $0x1b0] sm:$0xff]
        %v269 = vld [vmem:[%s166 + $0x1b8] sm:$0xff]
        %v270 = vld [vmem:[%s166 + $0x1c0] sm:$0xff]
        %v271 = vld [vmem:[%s166 + $0x1c8] sm:$0xff]
        %v272 = vld [vmem:[%s166 + $0x1d0] sm:$0xff]
        %v273 = vld [vmem:[%s166 + $0x1d8] sm:$0xff]
        %v274 = vld [vmem:[%s166 + $0x1e0] sm:$0xff]
        %v275 = vld [vmem:[%s166 + $0x1e8] sm:$0xff]
        %v276 = vld [vmem:[%s166 + $0x1f0] sm:$0xff]
        %v277 = vld [vmem:[%s166 + $0x1f8] sm:$0xff]
        %v278 = vld [vmem:[%s166 + $0x200] sm:$0xff]
        %v279 = vld [vmem:[%s166 + $0x208] sm:$0xff]
        %v280 = vld [vmem:[%s166 + $0x210] sm:$0xff]
        %v281 = vld [vmem:[%s166 + $0x218] sm:$0xff]
        %v282 = vld [vmem:[%s166 + $0x220] sm:$0xff]
        %v283 = vld [vmem:[%s166 + $0x228] sm:$0xff]
        %v284 = vld [vmem:[%s166 + $0x230] sm:$0xff]
        %v285 = vld [vmem:[%s166 + $0x238] sm:$0xff]
        %v286 = vld [vmem:[%s166 + $0x240] sm:$0xff]
        %v287 = vld [vmem:[%s166 + $0x248] sm:$0xff]
        %v288 = vld [vmem:[%s166 + $0x250] sm:$0xff]
        %v289 = vld [vmem:[%s166 + $0x258] sm:$0xff]
        %v290 = vld [vmem:[%s166 + $0x260] sm:$0xff]
        %v291 = vld [vmem:[%s166 + $0x268] sm:$0xff]
        %v292 = vld [vmem:[%s166 + $0x270] sm:$0xff]
        %v293 = vld [vmem:[%s166 + $0x278] sm:$0xff]
        %v294 = vld [vmem:[%s166 + $0x280] sm:$0xff]
        %v295 = vld [vmem:[%s166 + $0x288] sm:$0xff]
        %v296 = vld [vmem:[%s166 + $0x290] sm:$0xff]
        %v297 = vld [vmem:[%s166 + $0x298] sm:$0xff]
        %v298 = vld [vmem:[%s166 + $0x2a0] sm:$0xff]
        %v299 = vld [vmem:[%s166 + $0x2a8] sm:$0xff]
        %v300 = vld [vmem:[%s166 + $0x2b0] sm:$0xff]
        %v301 = vld [vmem:[%s166 + $0x2b8] sm:$0xff]
        %v302 = vld [vmem:[%s166 + $0x2c0] sm:$0xff]
        %v303 = vld [vmem:[%s166 + $0x2c8] sm:$0xff]
        %v304 = vld [vmem:[%s166 + $0x2d0] sm:$0xff]
        %v305 = vld [vmem:[%s166 + $0x2d8] sm:$0xff]
        %v306 = vld [vmem:[%s166 + $0x2e0] sm:$0xff]
        %v307 = vld [vmem:[%s166 + $0x2e8] sm:$0xff]
        %v308 = vld [vmem:[%s166 + $0x2f0] sm:$0xff]
        %v309 = vld [vmem:[%s166 + $0x2f8] sm:$0xff]
        %v310 = vld [vmem:[%s166 + $0x300] sm:$0xff]
        %v311 = vld [vmem:[%s166 + $0x308] sm:$0xff]
        %v312 = vld [vmem:[%s166 + $0x310] sm:$0xff]
        %v313 = vld [vmem:[%s166 + $0x318] sm:$0xff]
        %v314 = vld [vmem:[%s166 + $0x320] sm:$0xff]
        %v315 = vld [vmem:[%s166 + $0x328] sm:$0xff]
        %v316 = vld [vmem:[%s166 + $0x330] sm:$0xff]
        %v317 = vld [vmem:[%s166 + $0x338] sm:$0xff]
        %v318 = vld [vmem:[%s166 + $0x340] sm:$0xff]
        %v319 = vld [vmem:[%s166 + $0x348] sm:$0xff]
        %v320 = vld [vmem:[%s166 + $0x350] sm:$0xff]
        %v321 = vld [vmem:[%s166 + $0x358] sm:$0xff]
        %v322 = vld [vmem:[%s166 + $0x360] sm:$0xff]
        %v323 = vld [vmem:[%s166 + $0x368] sm:$0xff]
        %v324 = vld [vmem:[%s166 + $0x370] sm:$0xff]
        %v325 = vld [vmem:[%s166 + $0x378] sm:$0xff]
        %v326 = vld [vmem:[%s166 + $0x380] sm:$0xff]
        %v327 = vld [vmem:[%s166 + $0x388] sm:$0xff]
        %v328 = vld [vmem:[%s166 + $0x390] sm:$0xff]
        %v329 = vld [vmem:[%s166 + $0x398] sm:$0xff]
        %v330 = vld [vmem:[%s166 + $0x3a0] sm:$0xff]
        %v331 = vld [vmem:[%s166 + $0x3a8] sm:$0xff]
        %v332 = vld [vmem:[%s166 + $0x3b0] sm:$0xff]
        %v333 = vld [vmem:[%s166 + $0x3b8] sm:$0xff]
        %v334 = vld [vmem:[%s166 + $0x3c0] sm:$0xff]
        %v335 = vld [vmem:[%s166 + $0x3c8] sm:$0xff]
        %v336 = vld [vmem:[%s166 + $0x3d0] sm:$0xff]
        %v337 = vld [vmem:[%s166 + $0x3d8] sm:$0xff]
        %v338 = vld [vmem:[%s166 + $0x3e0] sm:$0xff]
        %v339 = vld [vmem:[%s166 + $0x3e8] sm:$0xff]
        %v340 = vld [vmem:[%s166 + $0x3f0] sm:$0xff]
        %v341 = vld [vmem:[%s166 + $0x3f8] sm:$0xff]
        %v342 = vld [vmem:[%s166 + $0x400] sm:$0xff]
        %v343 = vld [vmem:[%s166 + $0x408] sm:$0xff]
        %v344 = vld [vmem:[%s166 + $0x410] sm:$0xff]
        %v345 = vld [vmem:[%s166 + $0x418] sm:$0xff]
        %v346 = vld [vmem:[%s166 + $0x420] sm:$0xff]
        %v347 = vld [vmem:[%s166 + $0x428] sm:$0xff]
        %v348 = vld [vmem:[%s166 + $0x430] sm:$0xff]
        %v349 = vld [vmem:[%s166 + $0x438] sm:$0xff]
        %v350 = vld [vmem:[%s166 + $0x440] sm:$0xff]
        %v351 = vld [vmem:[%s166 + $0x448] sm:$0xff]
        %v352 = vld [vmem:[%s166 + $0x450] sm:$0xff]
        %v353 = vld [vmem:[%s166 + $0x458] sm:$0xff]
        %v354 = vld [vmem:[%s166 + $0x460] sm:$0xff]
        %v355 = vld [vmem:[%s166 + $0x468] sm:$0xff]
        %v356 = vld [vmem:[%s166 + $0x470] sm:$0xff]
        %v357 = vld [vmem:[%s166 + $0x478] sm:$0xff]
        %v358 = vld [vmem:[%s166 + $0x480] sm:$0xff]
        %v359 = vld [vmem:[%s166 + $0x488] sm:$0xff]
        %v360 = vld [vmem:[%s166 + $0x490] sm:$0xff]
        %v361 = vld [vmem:[%s166 + $0x498] sm:$0xff]
        %v362 = vld [vmem:[%s166 + $0x4a0] sm:$0xff]
        %v363 = vld [vmem:[%s166 + $0x4a8] sm:$0xff]
        %v364 = vld [vmem:[%s166 + $0x4b0] sm:$0xff]
        %v365 = vld [vmem:[%s166 + $0x4b8] sm:$0xff]
        %v366 = vld [vmem:[%s166 + $0x4c0] sm:$0xff]
        %v367 = vld [vmem:[%s166 + $0x4c8] sm:$0xff]
        %v368 = vld [vmem:[%s166 + $0x4d0] sm:$0xff]
        %v369 = vld [vmem:[%s166 + $0x4d8] sm:$0xff]
        %v370 = vld [vmem:[%s166 + $0x4e0] sm:$0xff]
        %v371 = vld [vmem:[%s166 + $0x4e8] sm:$0xff]
        %v372 = vld [vmem:[%s166 + $0x4f0] sm:$0xff]
        %v373 = vld [vmem:[%s166 + $0x4f8] sm:$0xff]
        %v374 = vld [vmem:[%s166 + $0x500] sm:$0xff]
        %v375 = vld [vmem:[%s166 + $0x508] sm:$0xff]
        %v376 = vld [vmem:[%s166 + $0x510] sm:$0xff]
        %v377 = vld [vmem:[%s166 + $0x518] sm:$0xff]
        %v378 = vld [vmem:[%s166 + $0x520] sm:$0xff]
        %v379 = vld [vmem:[%s166 + $0x528] sm:$0xff]
        %v380 = vld [vmem:[%s166 + $0x530] sm:$0xff]
        %v381 = vld [vmem:[%s166 + $0x538] sm:$0xff]
        %v382 = vld [vmem:[%s166 + $0x540] sm:$0xff]
        %v383 = vld [vmem:[%s166 + $0x548] sm:$0xff]
        %v384 = vld [vmem:[%s166 + $0x550] sm:$0xff]
        %v385 = vld [vmem:[%s166 + $0x558] sm:$0xff]
        %v386 = vld [vmem:[%s166 + $0x560] sm:$0xff]
        %v387 = vld [vmem:[%s166 + $0x568] sm:$0xff]
        %v388 = vld [vmem:[%s166 + $0x570] sm:$0xff]
        %v389 = vld [vmem:[%s166 + $0x578] sm:$0xff]
        %v390 = vld [vmem:[%s166 + $0x580] sm:$0xff]
        %v391 = vld [vmem:[%s166 + $0x588] sm:$0xff]
        %v392 = vld [vmem:[%s166 + $0x590] sm:$0xff]
        %v393 = vld [vmem:[%s166 + $0x598] sm:$0xff]
        %v394 = vld [vmem:[%s166 + $0x5a0] sm:$0xff]
        %v395 = vld [vmem:[%s166 + $0x5a8] sm:$0xff]
        %v396 = vld [vmem:[%s166 + $0x5b0] sm:$0xff]
        %v397 = vld [vmem:[%s166 + $0x5b8] sm:$0xff]
        %v398 = vld [vmem:[%s166 + $0x5c0] sm:$0xff]
        %v399 = vld [vmem:[%s166 + $0x5c8] sm:$0xff]
        %v400 = vld [vmem:[%s166 + $0x5d0] sm:$0xff]
        %v401 = vld [vmem:[%s166 + $0x5d8] sm:$0xff]
        %v402 = vld [vmem:[%s166 + $0x5e0] sm:$0xff]
        %v403 = vld [vmem:[%s166 + $0x5e8] sm:$0xff]
        %v404 = vld [vmem:[%s166 + $0x5f0] sm:$0xff]
        %v405 = vld [vmem:[%s166 + $0x5f8] sm:$0xff]
        %v406 = vld [vmem:[%s166 + $0x600] sm:$0xff]
        %v407 = vld [vmem:[%s166 + $0x608] sm:$0xff]
        %v408 = vld [vmem:[%s166 + $0x610] sm:$0xff]
        %v409 = vld [vmem:[%s166 + $0x618] sm:$0xff]
        %v410 = vld [vmem:[%s166 + $0x620] sm:$0xff]
        %v411 = vld [vmem:[%s166 + $0x628] sm:$0xff]
        %v412 = vld [vmem:[%s166 + $0x630] sm:$0xff]
        %v413 = vld [vmem:[%s166 + $0x638] sm:$0xff]
        %v414 = vld [vmem:[%s166 + $0x640] sm:$0xff]
        %v415 = vld [vmem:[%s166 + $0x648] sm:$0xff]
        %v416 = vld [vmem:[%s166 + $0x650] sm:$0xff]
        %v417 = vld [vmem:[%s166 + $0x658] sm:$0xff]
        %v418 = vld [vmem:[%s166 + $0x660] sm:$0xff]
        %v419 = vld [vmem:[%s166 + $0x668] sm:$0xff]
        %v420 = vld [vmem:[%s166 + $0x670] sm:$0xff]
        %v421 = vld [vmem:[%s166 + $0x678] sm:$0xff]
        %v422 = vld [vmem:[%s166 + $0x680] sm:$0xff]
        %v423 = vld [vmem:[%s166 + $0x688] sm:$0xff]
        %v424 = vld [vmem:[%s166 + $0x690] sm:$0xff]
        %v425 = vld [vmem:[%s166 + $0x698] sm:$0xff]
        %v426 = vld [vmem:[%s166 + $0x6a0] sm:$0xff]
        %v427 = vld [vmem:[%s166 + $0x6a8] sm:$0xff]
        %v428 = vld [vmem:[%s166 + $0x6b0] sm:$0xff]
        %v429 = vld [vmem:[%s166 + $0x6b8] sm:$0xff]
        %v430 = vld [vmem:[%s166 + $0x6c0] sm:$0xff]
        %v431 = vld [vmem:[%s166 + $0x6c8] sm:$0xff]
        %v432 = vld [vmem:[%s166 + $0x6d0] sm:$0xff]
        %v433 = vld [vmem:[%s166 + $0x6d8] sm:$0xff]
        %v434 = vld [vmem:[%s166 + $0x6e0] sm:$0xff]
        %v435 = vld [vmem:[%s166 + $0x6e8] sm:$0xff]
        %v436 = vld [vmem:[%s166 + $0x6f0] sm:$0xff]
        %v437 = vld [vmem:[%s166 + $0x6f8] sm:$0xff]
        %v438 = vld [vmem:[%s166 + $0x700] sm:$0xff]
        %v439 = vld [vmem:[%s166 + $0x708] sm:$0xff]
        %v440 = vld [vmem:[%s166 + $0x710] sm:$0xff]
        %v441 = vld [vmem:[%s166 + $0x718] sm:$0xff]
        %v442 = vld [vmem:[%s166 + $0x720] sm:$0xff]
        %v443 = vld [vmem:[%s166 + $0x728] sm:$0xff]
        %v444 = vld [vmem:[%s166 + $0x730] sm:$0xff]
        %v445 = vld [vmem:[%s166 + $0x738] sm:$0xff]
        %v446 = vld [vmem:[%s166 + $0x740] sm:$0xff]
        %v447 = vld [vmem:[%s166 + $0x748] sm:$0xff]
        %v448 = vld [vmem:[%s166 + $0x750] sm:$0xff]
        %v449 = vld [vmem:[%s166 + $0x758] sm:$0xff]
        %v450 = vld [vmem:[%s166 + $0x760] sm:$0xff]
        %v451 = vld [vmem:[%s166 + $0x768] sm:$0xff]
        %v452 = vld [vmem:[%s166 + $0x770] sm:$0xff]
        %v453 = vld [vmem:[%s166 + $0x778] sm:$0xff]
        %v454 = vld [vmem:[%s166 + $0x780] sm:$0xff]
        %v455 = vld [vmem:[%s166 + $0x788] sm:$0xff]
        %v456 = vld [vmem:[%s166 + $0x790] sm:$0xff]
        %v457 = vld [vmem:[%s166 + $0x798] sm:$0xff]
        %v458 = vld [vmem:[%s166 + $0x7a0] sm:$0xff]
        %v459 = vld [vmem:[%s166 + $0x7a8] sm:$0xff]
        %v460 = vld [vmem:[%s166 + $0x7b0] sm:$0xff]
        %v461 = vld [vmem:[%s166 + $0x7b8] sm:$0xff]
        %v462 = vld [vmem:[%s166 + $0x7c0] sm:$0xff]
        %v463 = vld [vmem:[%s166 + $0x7c8] sm:$0xff]
        %v464 = vld [vmem:[%s166 + $0x7d0] sm:$0xff]
        %v465 = vld [vmem:[%s166 + $0x7d8] sm:$0xff]
        %v466 = vld [vmem:[%s166 + $0x7e0] sm:$0xff]
        %v467 = vld [vmem:[%s166 + $0x7e8] sm:$0xff]
        %v468 = vld [vmem:[%s166 + $0x7f0] sm:$0xff]
        %v469 = vld [vmem:[%s166 + $0x7f8] sm:$0xff]
        %v470 = vld [vmem:[%s166 + $0x800] sm:$0xff]
        %v471 = vld [vmem:[%s166 + $0x808] sm:$0xff]
        %v472 = vld [vmem:[%s166 + $0x810] sm:$0xff]
        %v473 = vld [vmem:[%s166 + $0x818] sm:$0xff]
        %v474 = vld [vmem:[%s166 + $0x820] sm:$0xff]
        %v475 = vld [vmem:[%s166 + $0x828] sm:$0xff]
        %v476 = vld [vmem:[%s166 + $0x830] sm:$0xff]
        %v477 = vld [vmem:[%s166 + $0x838] sm:$0xff]
        %v478 = vld [vmem:[%s166 + $0x840] sm:$0xff]
        %v479 = vld [vmem:[%s166 + $0x848] sm:$0xff]
        %v480 = vld [vmem:[%s166 + $0x850] sm:$0xff]
        %v481 = vld [vmem:[%s166 + $0x858] sm:$0xff]
        %v482 = vld [vmem:[%s166 + $0x860] sm:$0xff]
        %v483 = vld [vmem:[%s166 + $0x868] sm:$0xff]
        %v484 = vld [vmem:[%s166 + $0x870] sm:$0xff]
        %v485 = vld [vmem:[%s166 + $0x878] sm:$0xff]
        %v486 = vld [vmem:[%s166 + $0x880] sm:$0xff]
        %v487 = vld [vmem:[%s166 + $0x888] sm:$0xff]
        %v488 = vld [vmem:[%s166 + $0x890] sm:$0xff]
        %v489 = vld [vmem:[%s166 + $0x898] sm:$0xff]
        %v490 = vld [vmem:[%s166 + $0x8a0] sm:$0xff]
        %v491 = vld [vmem:[%s166 + $0x8a8] sm:$0xff]
        %v492 = vld [vmem:[%s166 + $0x8b0] sm:$0xff]
        %v493 = vld [vmem:[%s166 + $0x8b8] sm:$0xff]
        %v494 = vld [vmem:[%s166 + $0x8c0] sm:$0xff]
        %v495 = vld [vmem:[%s166 + $0x8c8] sm:$0xff]
        %v496 = vld [vmem:[%s166 + $0x8d0] sm:$0xff]
        %v497 = vld [vmem:[%s166 + $0x8d8] sm:$0xff]
        %v498 = vld [vmem:[%s166 + $0x8e0] sm:$0xff]
        %v499 = vld [vmem:[%s166 + $0x8e8] sm:$0xff]
        %v500 = vld [vmem:[%s166 + $0x8f0] sm:$0xff]
        %v501 = vld [vmem:[%s166 + $0x8f8] sm:$0xff]
        %v502 = vld [vmem:[%s166 + $0x900] sm:$0xff]
        %v503 = vld [vmem:[%s166 + $0x908] sm:$0xff]
        %v504 = vld [vmem:[%s166 + $0x910] sm:$0xff]
        %v505 = vld [vmem:[%s166 + $0x918] sm:$0xff]
        %v506 = vld [vmem:[%s166 + $0x920] sm:$0xff]
        %v507 = vld [vmem:[%s166 + $0x928] sm:$0xff]
        %v508 = vld [vmem:[%s166 + $0x930] sm:$0xff]
        %v509 = vld [vmem:[%s166 + $0x938] sm:$0xff]
        %v510 = vld [vmem:[%s166 + $0x940] sm:$0xff]
        %v511 = vld [vmem:[%s166 + $0x948] sm:$0xff]
        %v512 = vld [vmem:[%s166 + $0x950] sm:$0xff]
        %v513 = vld [vmem:[%s166 + $0x958] sm:$0xff]
        %v514 = vld [vmem:[%s166 + $0x960] sm:$0xff]
        %v515 = vld [vmem:[%s166 + $0x968] sm:$0xff]
        %v516 = vld [vmem:[%s166 + $0x970] sm:$0xff]
        %v517 = vld [vmem:[%s166 + $0x978] sm:$0xff]
        %v518 = vld [vmem:[%s166 + $0x980] sm:$0xff]
        %v519 = vld [vmem:[%s166 + $0x988] sm:$0xff]
        %v520 = vld [vmem:[%s166 + $0x990] sm:$0xff]
        %v521 = vld [vmem:[%s166 + $0x998] sm:$0xff]
        %v522 = vld [vmem:[%s166 + $0x9a0] sm:$0xff]
        %v523 = vld [vmem:[%s166 + $0x9a8] sm:$0xff]
        %v524 = vld [vmem:[%s166 + $0x9b0] sm:$0xff]
        %v525 = vld [vmem:[%s166 + $0x9b8] sm:$0xff]
        %v526 = vld [vmem:[%s166 + $0x9c0] sm:$0xff]
        %v527 = vld [vmem:[%s166 + $0x9c8] sm:$0xff]
        %v528 = vld [vmem:[%s166 + $0x9d0] sm:$0xff]
        %v529 = vld [vmem:[%s166 + $0x9d8] sm:$0xff]
        %v530 = vld [vmem:[%s166 + $0x9e0] sm:$0xff]
        %v531 = vld [vmem:[%s166 + $0x9e8] sm:$0xff]
        %v532 = vld [vmem:[%s166 + $0x9f0] sm:$0xff]
        %v533 = vld [vmem:[%s166 + $0x9f8] sm:$0xff]
        %v534 = vld [vmem:[%s166 + $0xa00] sm:$0xff]
        %v535 = vld [vmem:[%s166 + $0xa08] sm:$0xff]
        %v536 = vld [vmem:[%s166 + $0xa10] sm:$0xff]
        %v537 = vld [vmem:[%s166 + $0xa18] sm:$0xff]
        %v538 = vld [vmem:[%s166 + $0xa20] sm:$0xff]
        %v539 = vld [vmem:[%s166 + $0xa28] sm:$0xff]
        %v540 = vld [vmem:[%s166 + $0xa30] sm:$0xff]
        %v541 = vld [vmem:[%s166 + $0xa38] sm:$0xff]
        %v542 = vld [vmem:[%s166 + $0xa40] sm:$0xff]
        %v543 = vld [vmem:[%s166 + $0xa48] sm:$0xff]
        %v544 = vld [vmem:[%s166 + $0xa50] sm:$0xff]
        %v545 = vld [vmem:[%s166 + $0xa58] sm:$0xff]
        %v546 = vld [vmem:[%s166 + $0xa60] sm:$0xff]
        %v547 = vld [vmem:[%s166 + $0xa68] sm:$0xff]
        %v548 = vld [vmem:[%s166 + $0xa70] sm:$0xff]
        %v549 = vld [vmem:[%s166 + $0xa78] sm:$0xff]
        %v550 = vld [vmem:[%s166 + $0xa80] sm:$0xff]
        %v551 = vld [vmem:[%s166 + $0xa88] sm:$0xff]
        %v552 = vld [vmem:[%s166 + $0xa90] sm:$0xff]
        %v553 = vld [vmem:[%s166 + $0xa98] sm:$0xff]
        %v554 = vld [vmem:[%s166 + $0xaa0] sm:$0xff]
        %v555 = vld [vmem:[%s166 + $0xaa8] sm:$0xff]
        %v556 = vld [vmem:[%s166 + $0xab0] sm:$0xff]
        %v557 = vld [vmem:[%s166 + $0xab8] sm:$0xff]
        %v558 = vld [vmem:[%s166 + $0xac0] sm:$0xff]
        %v559 = vld [vmem:[%s166 + $0xac8] sm:$0xff]
        %v560 = vld [vmem:[%s166 + $0xad0] sm:$0xff]
        %v561 = vld [vmem:[%s166 + $0xad8] sm:$0xff]
        %v562 = vld [vmem:[%s166 + $0xae0] sm:$0xff]
        %v563 = vld [vmem:[%s166 + $0xae8] sm:$0xff]
        %v564 = vld [vmem:[%s166 + $0xaf0] sm:$0xff]
        %v565 = vld [vmem:[%s166 + $0xaf8] sm:$0xff]
        %v566 = vld [vmem:[%s166 + $0xb00] sm:$0xff]
        %v567 = vld [vmem:[%s166 + $0xb08] sm:$0xff]
        %v568 = vld [vmem:[%s166 + $0xb10] sm:$0xff]
        %v569 = vld [vmem:[%s166 + $0xb18] sm:$0xff]
        %v570 = vld [vmem:[%s166 + $0xb20] sm:$0xff]
        %v571 = vld [vmem:[%s166 + $0xb28] sm:$0xff]
        %v572 = vld [vmem:[%s166 + $0xb30] sm:$0xff]
        %v573 = vld [vmem:[%s166 + $0xb38] sm:$0xff]
        %v574 = vld [vmem:[%s166 + $0xb40] sm:$0xff]
        %v575 = vld [vmem:[%s166 + $0xb48] sm:$0xff]
        %v576 = vld [vmem:[%s166 + $0xb50] sm:$0xff]
        %v577 = vld [vmem:[%s166 + $0xb58] sm:$0xff]
        %v578 = vld [vmem:[%s166 + $0xb60] sm:$0xff]
        %v579 = vld [vmem:[%s166 + $0xb68] sm:$0xff]
        %v580 = vld [vmem:[%s166 + $0xb70] sm:$0xff]
        %v581 = vld [vmem:[%s166 + $0xb78] sm:$0xff]
        %v582 = vld [vmem:[%s166 + $0xb80] sm:$0xff]
        %v583 = vld [vmem:[%s166 + $0xb88] sm:$0xff]
        %v584 = vld [vmem:[%s166 + $0xb90] sm:$0xff]
        %v585 = vld [vmem:[%s166 + $0xb98] sm:$0xff]
        %v586 = vld [vmem:[%s166 + $0xba0] sm:$0xff]
        %v587 = vld [vmem:[%s166 + $0xba8] sm:$0xff]
        %v588 = vld [vmem:[%s166 + $0xbb0] sm:$0xff]
        %v589 = vld [vmem:[%s166 + $0xbb8] sm:$0xff]
        %v590 = vld [vmem:[%s166 + $0xbc0] sm:$0xff]
        %v591 = vld [vmem:[%s166 + $0xbc8] sm:$0xff]
        %v592 = vld [vmem:[%s166 + $0xbd0] sm:$0xff]
        %v593 = vld [vmem:[%s166 + $0xbd8] sm:$0xff]
        %v594 = vld [vmem:[%s166 + $0xbe0] sm:$0xff]
        %v595 = vld [vmem:[%s166 + $0xbe8] sm:$0xff]
        %v596 = vld [vmem:[%s166 + $0xbf0] sm:$0xff]
        %v597 = vld [vmem:[%s166 + $0xbf8] sm:$0xff]
        %v598 = vld [vmem:[%s166 + $0xc00] sm:$0xff]
        %v599 = vld [vmem:[%s166 + $0xc08] sm:$0xff]
        %v600 = vld [vmem:[%s166 + $0xc10] sm:$0xff]
        %v601 = vld [vmem:[%s166 + $0xc18] sm:$0xff]
        %v602 = vld [vmem:[%s166 + $0xc20] sm:$0xff]
        %v603 = vld [vmem:[%s166 + $0xc28] sm:$0xff]
        %v604 = vld [vmem:[%s166 + $0xc30] sm:$0xff]
        %v605 = vld [vmem:[%s166 + $0xc38] sm:$0xff]
        %v606 = vld [vmem:[%s166 + $0xc40] sm:$0xff]
        %v607 = vld [vmem:[%s166 + $0xc48] sm:$0xff]
        %v608 = vld [vmem:[%s166 + $0xc50] sm:$0xff]
        %v609 = vld [vmem:[%s166 + $0xc58] sm:$0xff]
        %v610 = vld [vmem:[%s166 + $0xc60] sm:$0xff]
        %v611 = vld [vmem:[%s166 + $0xc68] sm:$0xff]
        %v612 = vld [vmem:[%s166 + $0xc70] sm:$0xff]
        %v613 = vld [vmem:[%s166 + $0xc78] sm:$0xff]
        %v614 = vld [vmem:[%s166 + $0xc80] sm:$0xff]
        %v615 = vld [vmem:[%s166 + $0xc88] sm:$0xff]
        %v616 = vld [vmem:[%s166 + $0xc90] sm:$0xff]
        %v617 = vld [vmem:[%s166 + $0xc98] sm:$0xff]
        %v618 = vld [vmem:[%s166 + $0xca0] sm:$0xff]
        %v619 = vld [vmem:[%s166 + $0xca8] sm:$0xff]
        %v620 = vld [vmem:[%s166 + $0xcb0] sm:$0xff]
        %v621 = vld [vmem:[%s166 + $0xcb8] sm:$0xff]
        %v622 = vld [vmem:[%s166 + $0xcc0] sm:$0xff]
        %v623 = vld [vmem:[%s166 + $0xcc8] sm:$0xff]
        %v624 = vld [vmem:[%s166 + $0xcd0] sm:$0xff]
        %v625 = vld [vmem:[%s166 + $0xcd8] sm:$0xff]
        %v626 = vld [vmem:[%s166 + $0xce0] sm:$0xff]
        %v627 = vld [vmem:[%s166 + $0xce8] sm:$0xff]
        %v628 = vld [vmem:[%s166 + $0xcf0] sm:$0xff]
        %v629 = vld [vmem:[%s166 + $0xcf8] sm:$0xff]
        %v630 = vld [vmem:[%s166 + $0xd00] sm:$0xff]
        %v631 = vld [vmem:[%s166 + $0xd08] sm:$0xff]
        %v632 = vld [vmem:[%s166 + $0xd10] sm:$0xff]
        %v633 = vld [vmem:[%s166 + $0xd18] sm:$0xff]
        %v634 = vld [vmem:[%s166 + $0xd20] sm:$0xff]
        %v635 = vld [vmem:[%s166 + $0xd28] sm:$0xff]
        %v636 = vld [vmem:[%s166 + $0xd30] sm:$0xff]
        %v637 = vld [vmem:[%s166 + $0xd38] sm:$0xff]
        %v638 = vld [vmem:[%s166 + $0xd40] sm:$0xff]
        %v639 = vld [vmem:[%s166 + $0xd48] sm:$0xff]
        %v640 = vld [vmem:[%s166 + $0xd50] sm:$0xff]
        %v641 = vld [vmem:[%s166 + $0xd58] sm:$0xff]
        %v642 = vld [vmem:[%s166 + $0xd60] sm:$0xff]
        %v643 = vld [vmem:[%s166 + $0xd68] sm:$0xff]
        %v644 = vld [vmem:[%s166 + $0xd70] sm:$0xff]
        %v645 = vld [vmem:[%s166 + $0xd78] sm:$0xff]
        %v646 = vld [vmem:[%s166 + $0xd80] sm:$0xff]
        %v647 = vld [vmem:[%s166 + $0xd88] sm:$0xff]
        %v648 = vld [vmem:[%s166 + $0xd90] sm:$0xff]
        %v649 = vld [vmem:[%s166 + $0xd98] sm:$0xff]
        %v650 = vld [vmem:[%s166 + $0xda0] sm:$0xff]
        %v651 = vld [vmem:[%s166 + $0xda8] sm:$0xff]
        %v652 = vld [vmem:[%s166 + $0xdb0] sm:$0xff]
        %v653 = vld [vmem:[%s166 + $0xdb8] sm:$0xff]
        %v654 = vld [vmem:[%s166 + $0xdc0] sm:$0xff]
        %v655 = vld [vmem:[%s166 + $0xdc8] sm:$0xff]
        %v656 = vld [vmem:[%s166 + $0xdd0] sm:$0xff]
        %v657 = vld [vmem:[%s166 + $0xdd8] sm:$0xff]
        %v658 = vld [vmem:[%s166 + $0xde0] sm:$0xff]
        %v659 = vld [vmem:[%s166 + $0xde8] sm:$0xff]
        %v660 = vld [vmem:[%s166 + $0xdf0] sm:$0xff]
        %v661 = vld [vmem:[%s166 + $0xdf8] sm:$0xff]
        %v662 = vld [vmem:[%s166 + $0xe00] sm:$0xff]
        %v663 = vld [vmem:[%s166 + $0xe08] sm:$0xff]
        %v664 = vld [vmem:[%s166 + $0xe10] sm:$0xff]
        %v665 = vld [vmem:[%s166 + $0xe18] sm:$0xff]
        %v666 = vld [vmem:[%s166 + $0xe20] sm:$0xff]
        %v667 = vld [vmem:[%s166 + $0xe28] sm:$0xff]
        %v668 = vld [vmem:[%s166 + $0xe30] sm:$0xff]
        %v669 = vld [vmem:[%s166 + $0xe38] sm:$0xff]
        %v670 = vld [vmem:[%s166 + $0xe40] sm:$0xff]
        %v671 = vld [vmem:[%s166 + $0xe48] sm:$0xff]
        %v672 = vld [vmem:[%s166 + $0xe50] sm:$0xff]
        %v673 = vld [vmem:[%s166 + $0xe58] sm:$0xff]
        %v674 = vld [vmem:[%s166 + $0xe60] sm:$0xff]
        %v675 = vld [vmem:[%s166 + $0xe68] sm:$0xff]
        %v676 = vld [vmem:[%s166 + $0xe70] sm:$0xff]
        %v677 = vld [vmem:[%s166 + $0xe78] sm:$0xff]
        %v678 = vld [vmem:[%s166 + $0xe80] sm:$0xff]
        %v679 = vld [vmem:[%s166 + $0xe88] sm:$0xff]
        %v680 = vld [vmem:[%s166 + $0xe90] sm:$0xff]
        %v681 = vld [vmem:[%s166 + $0xe98] sm:$0xff]
        %v682 = vld [vmem:[%s166 + $0xea0] sm:$0xff]
        %v683 = vld [vmem:[%s166 + $0xea8] sm:$0xff]
        %v684 = vld [vmem:[%s166 + $0xeb0] sm:$0xff]
        %v685 = vld [vmem:[%s166 + $0xeb8] sm:$0xff]
        %v686 = vld [vmem:[%s166 + $0xec0] sm:$0xff]
        %v687 = vld [vmem:[%s166 + $0xec8] sm:$0xff]
        %v688 = vld [vmem:[%s166 + $0xed0] sm:$0xff]
        %v689 = vld [vmem:[%s166 + $0xed8] sm:$0xff]
        %v690 = vld [vmem:[%s166 + $0xee0] sm:$0xff]
        %v691 = vld [vmem:[%s166 + $0xee8] sm:$0xff]
        %v692 = vld [vmem:[%s166 + $0xef0] sm:$0xff]
        %v693 = vld [vmem:[%s166 + $0xef8] sm:$0xff]
        %v694 = vld [vmem:[%s166 + $0xf00] sm:$0xff]
        %v695 = vld [vmem:[%s166 + $0xf08] sm:$0xff]
        %v696 = vld [vmem:[%s166 + $0xf10] sm:$0xff]
        %v697 = vld [vmem:[%s166 + $0xf18] sm:$0xff]
        %v698 = vld [vmem:[%s166 + $0xf20] sm:$0xff]
        %v699 = vld [vmem:[%s166 + $0xf28] sm:$0xff]
        %v700 = vld [vmem:[%s166 + $0xf30] sm:$0xff]
        %v701 = vld [vmem:[%s166 + $0xf38] sm:$0xff]
        %v702 = vld [vmem:[%s166 + $0xf40] sm:$0xff]
        %v703 = vld [vmem:[%s166 + $0xf48] sm:$0xff]
        %v704 = vld [vmem:[%s166 + $0xf50] sm:$0xff]
        %v705 = vld [vmem:[%s166 + $0xf58] sm:$0xff]
        %v706 = vld [vmem:[%s166 + $0xf60] sm:$0xff]
        %v707 = vld [vmem:[%s166 + $0xf68] sm:$0xff]
        %v708 = vld [vmem:[%s166 + $0xf70] sm:$0xff]
        %v709 = vld [vmem:[%s166 + $0xf78] sm:$0xff]
        %v710 = vld [vmem:[%s166 + $0xf80] sm:$0xff]
        %v711 = vld [vmem:[%s166 + $0xf88] sm:$0xff]
        %v712 = vld [vmem:[%s166 + $0xf90] sm:$0xff]
        %v713 = vld [vmem:[%s166 + $0xf98] sm:$0xff]
        %v714 = vld [vmem:[%s166 + $0xfa0] sm:$0xff]
        %v715 = vld [vmem:[%s166 + $0xfa8] sm:$0xff]
        %v716 = vld [vmem:[%s166 + $0xfb0] sm:$0xff]
        %v717 = vld [vmem:[%s166 + $0xfb8] sm:$0xff]
        %v718 = vld [vmem:[%s166 + $0xfc0] sm:$0xff]
        %v719 = vld [vmem:[%s166 + $0xfc8] sm:$0xff]
        %v720 = vld [vmem:[%s166 + $0xfd0] sm:$0xff]
        %v721 = vld [vmem:[%s166 + $0xfd8] sm:$0xff]
        %v722 = vld [vmem:[%s166 + $0xfe0] sm:$0xff]
        %v723 = vld [vmem:[%s166 + $0xfe8] sm:$0xff]
        %v724 = vld [vmem:[%s166 + $0xff0] sm:$0xff]
        %v725 = vld [vmem:[%s166 + $0xff8] sm:$0xff]
        %v728 = vcombine.high %v212, %v212
        %v730 = vunpack.c.l.s4 1983009808
        %v731 = vunpack.c.0.s8 %v730
        %v732 = vlaneseq
        %v733 = vshrl.u32 %v732, 7
        %v734 = vsub.s32 %v731, %v733
        %v735 = vrot.slane %v212, %v734
        %v737 = vunpack.c.l.s4 1983009808
        %v738 = vunpack.c.0.s8 %v737
        %v739 = vlaneseq
        %v740 = vshrl.u32 %v739, 7
        %v741 = vsub.s32 %v738, %v740
        %v742 = vrot.slane %v728, %v741
        %v743 = vcombine.high %v735, %v735
        %v744 = vcombine.high %v742, %v742
        %v745 = vcombine.high %v213, %v213
        %v747 = vunpack.c.l.s4 1983009808
        %v748 = vunpack.c.0.s8 %v747
        %v749 = vlaneseq
        %v750 = vshrl.u32 %v749, 7
        %v751 = vsub.s32 %v748, %v750
        %v752 = vrot.slane %v213, %v751
        %v754 = vunpack.c.l.s4 1983009808
        %v755 = vunpack.c.0.s8 %v754
        %v756 = vlaneseq
        %v757 = vshrl.u32 %v756, 7
        %v758 = vsub.s32 %v755, %v757
        %v759 = vrot.slane %v745, %v758
        %v760 = vcombine.high %v752, %v752
        %v761 = vcombine.high %v759, %v759
        %770 = vmatprep.subr.mxu0 %v275
        %771 = vmatpush1.msra.mxu0 %v274
        %772 = vmatprep.subr.mxu0 %v271
        %773 = vmatpush1.msra.mxu0 %v270
        %774 = vmatprep.subr.mxu0 %v267
        %775 = vmatpush1.msra.mxu0 %v266
        %776 = vmatprep.subr.mxu0 %v263
        %777 = vmatpush1.msra.mxu0 %v262
        %778 = vmatprep.subr.mxu0 %v259
        %779 = vmatpush1.msra.mxu0 %v258
        %780 = vmatprep.subr.mxu0 %v255
        %781 = vmatpush1.msra.mxu0 %v254
        %782 = vmatprep.subr.mxu0 %v251
        %783 = vmatpush1.msra.mxu0 %v250
        %784 = vmatprep.subr.mxu0 %v247
        %785 = vmatpush1.msra.mxu0 %v246
        %786 = vmatprep.subr.mxu0 %v243
        %787 = vmatpush1.msra.mxu0 %v242
        %788 = vmatprep.subr.mxu0 %v239
        %789 = vmatpush1.msra.mxu0 %v238
        %790 = vmatprep.subr.mxu0 %v235
        %791 = vmatpush1.msra.mxu0 %v234
        %792 = vmatprep.subr.mxu0 %v231
        %793 = vmatpush1.msra.mxu0 %v230
        %794 = vmatprep.subr.mxu0 %v227
        %795 = vmatpush1.msra.mxu0 %v226
        %796 = vmatprep.subr.mxu0 %v223
        %797 = vmatpush1.msra.mxu0 %v222
        %798 = vmatprep.subr.mxu0 %v219
        %799 = vmatpush1.msra.mxu0 %v218
        %800 = vmatprep.subr.mxu0 %v215
        %801 = vmatpush1.msra.mxu0 %v214
        %802 = vmatprep.subr.mxu0 %v339
        %803 = vmatpush2.msra.mxu0 %v338
        %804 = vmatprep.subr.mxu0 %v335
        %805 = vmatpush2.msra.mxu0 %v334
        %806 = vmatprep.subr.mxu0 %v331
        %807 = vmatpush2.msra.mxu0 %v330
        %808 = vmatprep.subr.mxu0 %v327
        %809 = vmatpush2.msra.mxu0 %v326
        %810 = vmatprep.subr.mxu0 %v323
        %811 = vmatpush2.msra.mxu0 %v322
        %812 = vmatprep.subr.mxu0 %v319
        %813 = vmatpush2.msra.mxu0 %v318
        %814 = vmatprep.subr.mxu0 %v315
        %815 = vmatpush2.msra.mxu0 %v314
        %816 = vmatprep.subr.mxu0 %v311
        %817 = vmatpush2.msra.mxu0 %v310
        %818 = vmatprep.subr.mxu0 %v307
        %819 = vmatpush2.msra.mxu0 %v306
        %820 = vmatprep.subr.mxu0 %v303
        %821 = vmatpush2.msra.mxu0 %v302
        %822 = vmatprep.subr.mxu0 %v299
        %823 = vmatpush2.msra.mxu0 %v298
        %824 = vmatprep.subr.mxu0 %v295
        %825 = vmatpush2.msra.mxu0 %v294
        %826 = vmatprep.subr.mxu0 %v291
        %827 = vmatpush2.msra.mxu0 %v290
        %828 = vmatprep.subr.mxu0 %v287
        %829 = vmatpush2.msra.mxu0 %v286
        %830 = vmatprep.subr.mxu0 %v283
        %831 = vmatpush2.msra.mxu0 %v282
        %832 = vmatprep.subr.mxu0 %v279
        %833 = vmatpush2.msra.mxu0 %v278
        %834 = vmatprep.mubr.f32.mxu0 %v743
        %835 = vmatmul.mubr.f32.gmra.mxu0 %v735
        %v836 = vpop.f32.mrf.mxu0
        %v837 = vadd.f32 0.0, %v836
        %v838 = vpop.f32.mrf.mxu0
        %v839 = vadd.f32 0.0, %v838
        %840 = vdwg.mxu0
        %841 = vmatprep.subr.mxu0 %v403
        %842 = vmatpush1.msra.mxu0 %v402
        %843 = vmatprep.subr.mxu0 %v399
        %844 = vmatpush1.msra.mxu0 %v398
        %845 = vmatprep.subr.mxu0 %v395
        %846 = vmatpush1.msra.mxu0 %v394
        %847 = vmatprep.subr.mxu0 %v391
        %848 = vmatpush1.msra.mxu0 %v390
        %849 = vmatprep.subr.mxu0 %v387
        %850 = vmatpush1.msra.mxu0 %v386
        %851 = vmatprep.subr.mxu0 %v383
        %852 = vmatpush1.msra.mxu0 %v382
        %853 = vmatprep.subr.mxu0 %v379
        %854 = vmatpush1.msra.mxu0 %v378
        %855 = vmatprep.subr.mxu0 %v375
        %856 = vmatpush1.msra.mxu0 %v374
        %857 = vmatprep.subr.mxu0 %v371
        %858 = vmatpush1.msra.mxu0 %v370
        %859 = vmatprep.subr.mxu0 %v367
        %860 = vmatpush1.msra.mxu0 %v366
        %861 = vmatprep.subr.mxu0 %v363
        %862 = vmatpush1.msra.mxu0 %v362
        %863 = vmatprep.subr.mxu0 %v359
        %864 = vmatpush1.msra.mxu0 %v358
        %865 = vmatprep.subr.mxu0 %v355
        %866 = vmatpush1.msra.mxu0 %v354
        %867 = vmatprep.subr.mxu0 %v351
        %868 = vmatpush1.msra.mxu0 %v350
        %869 = vmatprep.subr.mxu0 %v347
        %870 = vmatpush1.msra.mxu0 %v346
        %871 = vmatprep.subr.mxu0 %v343
        %872 = vmatpush1.msra.mxu0 %v342
        %873 = vmatprep.subr.mxu0 %v467
        %874 = vmatpush2.msra.mxu0 %v466
        %875 = vmatprep.subr.mxu0 %v463
        %876 = vmatpush2.msra.mxu0 %v462
        %877 = vmatprep.subr.mxu0 %v459
        %878 = vmatpush2.msra.mxu0 %v458
        %879 = vmatprep.subr.mxu0 %v455
        %880 = vmatpush2.msra.mxu0 %v454
        %881 = vmatprep.subr.mxu0 %v451
        %882 = vmatpush2.msra.mxu0 %v450
        %883 = vmatprep.subr.mxu0 %v447
        %884 = vmatpush2.msra.mxu0 %v446
        %885 = vmatprep.subr.mxu0 %v443
        %886 = vmatpush2.msra.mxu0 %v442
        %887 = vmatprep.subr.mxu0 %v439
        %888 = vmatpush2.msra.mxu0 %v438
        %889 = vmatprep.subr.mxu0 %v435
        %890 = vmatpush2.msra.mxu0 %v434
        %891 = vmatprep.subr.mxu0 %v431
        %892 = vmatpush2.msra.mxu0 %v430
        %893 = vmatprep.subr.mxu0 %v427
        %894 = vmatpush2.msra.mxu0 %v426
        %895 = vmatprep.subr.mxu0 %v423
        %896 = vmatpush2.msra.mxu0 %v422
        %897 = vmatprep.subr.mxu0 %v419
        %898 = vmatpush2.msra.mxu0 %v418
        %899 = vmatprep.subr.mxu0 %v415
        %900 = vmatpush2.msra.mxu0 %v414
        %901 = vmatprep.subr.mxu0 %v411
        %902 = vmatpush2.msra.mxu0 %v410
        %903 = vmatprep.subr.mxu0 %v407
        %904 = vmatpush2.msra.mxu0 %v406
        %905 = vmatprep.mubr.f32.mxu0 %v744
        %906 = vmatmul.mubr.f32.gmra.mxu0 %v742
        %v907 = vpop.f32.mrf.mxu0
        %v908 = vadd.f32 %v837, %v907
        %v909 = vpop.f32.mrf.mxu0
        %v910 = vadd.f32 %v839, %v909
        %911 = vdwg.mxu0
        %912 = vmatprep.subr.mxu0 %v531
        %913 = vmatpush1.msra.mxu0 %v530
        %914 = vmatprep.subr.mxu0 %v527
        %915 = vmatpush1.msra.mxu0 %v526
        %916 = vmatprep.subr.mxu0 %v523
        %917 = vmatpush1.msra.mxu0 %v522
        %918 = vmatprep.subr.mxu0 %v519
        %919 = vmatpush1.msra.mxu0 %v518
        %920 = vmatprep.subr.mxu0 %v515
        %921 = vmatpush1.msra.mxu0 %v514
        %922 = vmatprep.subr.mxu0 %v511
        %923 = vmatpush1.msra.mxu0 %v510
        %924 = vmatprep.subr.mxu0 %v507
        %925 = vmatpush1.msra.mxu0 %v506
        %926 = vmatprep.subr.mxu0 %v503
        %927 = vmatpush1.msra.mxu0 %v502
        %928 = vmatprep.subr.mxu0 %v499
        %929 = vmatpush1.msra.mxu0 %v498
        %930 = vmatprep.subr.mxu0 %v495
        %931 = vmatpush1.msra.mxu0 %v494
        %932 = vmatprep.subr.mxu0 %v491
        %933 = vmatpush1.msra.mxu0 %v490
        %934 = vmatprep.subr.mxu0 %v487
        %935 = vmatpush1.msra.mxu0 %v486
        %936 = vmatprep.subr.mxu0 %v483
        %937 = vmatpush1.msra.mxu0 %v482
        %938 = vmatprep.subr.mxu0 %v479
        %939 = vmatpush1.msra.mxu0 %v478
        %940 = vmatprep.subr.mxu0 %v475
        %941 = vmatpush1.msra.mxu0 %v474
        %942 = vmatprep.subr.mxu0 %v471
        %943 = vmatpush1.msra.mxu0 %v470
        %944 = vmatprep.subr.mxu0 %v595
        %945 = vmatpush2.msra.mxu0 %v594
        %946 = vmatprep.subr.mxu0 %v591
        %947 = vmatpush2.msra.mxu0 %v590
        %948 = vmatprep.subr.mxu0 %v587
        %949 = vmatpush2.msra.mxu0 %v586
        %950 = vmatprep.subr.mxu0 %v583
        %951 = vmatpush2.msra.mxu0 %v582
        %952 = vmatprep.subr.mxu0 %v579
        %953 = vmatpush2.msra.mxu0 %v578
        %954 = vmatprep.subr.mxu0 %v575
        %955 = vmatpush2.msra.mxu0 %v574
        %956 = vmatprep.subr.mxu0 %v571
        %957 = vmatpush2.msra.mxu0 %v570
        %958 = vmatprep.subr.mxu0 %v567
        %959 = vmatpush2.msra.mxu0 %v566
        %960 = vmatprep.subr.mxu0 %v563
        %961 = vmatpush2.msra.mxu0 %v562
        %962 = vmatprep.subr.mxu0 %v559
        %963 = vmatpush2.msra.mxu0 %v558
        %964 = vmatprep.subr.mxu0 %v555
        %965 = vmatpush2.msra.mxu0 %v554
        %966 = vmatprep.subr.mxu0 %v551
        %967 = vmatpush2.msra.mxu0 %v550
        %968 = vmatprep.subr.mxu0 %v547
        %969 = vmatpush2.msra.mxu0 %v546
        %970 = vmatprep.subr.mxu0 %v543
        %971 = vmatpush2.msra.mxu0 %v542
        %972 = vmatprep.subr.mxu0 %v539
        %973 = vmatpush2.msra.mxu0 %v538
        %974 = vmatprep.subr.mxu0 %v535
        %975 = vmatpush2.msra.mxu0 %v534
        %976 = vmatprep.mubr.f32.mxu0 %v760
        %977 = vmatmul.mubr.f32.gmra.mxu0 %v752
        %v978 = vpop.f32.mrf.mxu0
        %v979 = vadd.f32 %v908, %v978
        %v980 = vpop.f32.mrf.mxu0
        %v981 = vadd.f32 %v910, %v980
        %982 = vdwg.mxu0
        %983 = vmatprep.subr.mxu0 %v659
        %984 = vmatpush1.msra.mxu0 %v658
        %985 = vmatprep.subr.mxu0 %v655
        %986 = vmatpush1.msra.mxu0 %v654
        %987 = vmatprep.subr.mxu0 %v651
        %988 = vmatpush1.msra.mxu0 %v650
        %989 = vmatprep.subr.mxu0 %v647
        %990 = vmatpush1.msra.mxu0 %v646
        %991 = vmatprep.subr.mxu0 %v643
        %992 = vmatpush1.msra.mxu0 %v642
        %993 = vmatprep.subr.mxu0 %v639
        %994 = vmatpush1.msra.mxu0 %v638
        %995 = vmatprep.subr.mxu0 %v635
        %996 = vmatpush1.msra.mxu0 %v634
        %997 = vmatprep.subr.mxu0 %v631
        %998 = vmatpush1.msra.mxu0 %v630
        %999 = vmatprep.subr.mxu0 %v627
        %1000 = vmatpush1.msra.mxu0 %v626
        %1001 = vmatprep.subr.mxu0 %v623
        %1002 = vmatpush1.msra.mxu0 %v622
        %1003 = vmatprep.subr.mxu0 %v619
        %1004 = vmatpush1.msra.mxu0 %v618
        %1005 = vmatprep.subr.mxu0 %v615
        %1006 = vmatpush1.msra.mxu0 %v614
        %1007 = vmatprep.subr.mxu0 %v611
        %1008 = vmatpush1.msra.mxu0 %v610
        %1009 = vmatprep.subr.mxu0 %v607
        %1010 = vmatpush1.msra.mxu0 %v606
        %1011 = vmatprep.subr.mxu0 %v603
        %1012 = vmatpush1.msra.mxu0 %v602
        %1013 = vmatprep.subr.mxu0 %v599
        %1014 = vmatpush1.msra.mxu0 %v598
        %1015 = vmatprep.subr.mxu0 %v723
        %1016 = vmatpush2.msra.mxu0 %v722
        %1017 = vmatprep.subr.mxu0 %v719
        %1018 = vmatpush2.msra.mxu0 %v718
        %1019 = vmatprep.subr.mxu0 %v715
        %1020 = vmatpush2.msra.mxu0 %v714
        %1021 = vmatprep.subr.mxu0 %v711
        %1022 = vmatpush2.msra.mxu0 %v710
        %1023 = vmatprep.subr.mxu0 %v707
        %1024 = vmatpush2.msra.mxu0 %v706
        %1025 = vmatprep.subr.mxu0 %v703
        %1026 = vmatpush2.msra.mxu0 %v702
        %1027 = vmatprep.subr.mxu0 %v699
        %1028 = vmatpush2.msra.mxu0 %v698
        %1029 = vmatprep.subr.mxu0 %v695
        %1030 = vmatpush2.msra.mxu0 %v694
        %1031 = vmatprep.subr.mxu0 %v691
        %1032 = vmatpush2.msra.mxu0 %v690
        %1033 = vmatprep.subr.mxu0 %v687
        %1034 = vmatpush2.msra.mxu0 %v686
        %1035 = vmatprep.subr.mxu0 %v683
        %1036 = vmatpush2.msra.mxu0 %v682
        %1037 = vmatprep.subr.mxu0 %v679
        %1038 = vmatpush2.msra.mxu0 %v678
        %1039 = vmatprep.subr.mxu0 %v675
        %1040 = vmatpush2.msra.mxu0 %v674
        %1041 = vmatprep.subr.mxu0 %v671
        %1042 = vmatpush2.msra.mxu0 %v670
        %1043 = vmatprep.subr.mxu0 %v667
        %1044 = vmatpush2.msra.mxu0 %v666
        %1045 = vmatprep.subr.mxu0 %v663
        %1046 = vmatpush2.msra.mxu0 %v662
        %1047 = vmatprep.mubr.f32.mxu0 %v761
        %1048 = vmatmul.mubr.f32.gmra.mxu0 %v759
        %v1049 = vpop.f32.mrf.mxu0
        %v1050 = vadd.f32 %v979, %v1049
        %v1051 = vpop.f32.mrf.mxu0
        %v1052 = vadd.f32 %v981, %v1051
        %1053 = vdwg.mxu0
        %1054 = vmatprep.subr.mxu0 %v277
        %1055 = vmatpush1.msra.mxu0 %v276
        %1056 = vmatprep.subr.mxu0 %v273
        %1057 = vmatpush1.msra.mxu0 %v272
        %1058 = vmatprep.subr.mxu0 %v269
        %1059 = vmatpush1.msra.mxu0 %v268
        %1060 = vmatprep.subr.mxu0 %v265
        %1061 = vmatpush1.msra.mxu0 %v264
        %1062 = vmatprep.subr.mxu0 %v261
        %1063 = vmatpush1.msra.mxu0 %v260
        %1064 = vmatprep.subr.mxu0 %v257
        %1065 = vmatpush1.msra.mxu0 %v256
        %1066 = vmatprep.subr.mxu0 %v253
        %1067 = vmatpush1.msra.mxu0 %v252
        %1068 = vmatprep.subr.mxu0 %v249
        %1069 = vmatpush1.msra.mxu0 %v248
        %1070 = vmatprep.subr.mxu0 %v245
        %1071 = vmatpush1.msra.mxu0 %v244
        %1072 = vmatprep.subr.mxu0 %v241
        %1073 = vmatpush1.msra.mxu0 %v240
        %1074 = vmatprep.subr.mxu0 %v237
        %1075 = vmatpush1.msra.mxu0 %v236
        %1076 = vmatprep.subr.mxu0 %v233
        %1077 = vmatpush1.msra.mxu0 %v232
        %1078 = vmatprep.subr.mxu0 %v229
        %1079 = vmatpush1.msra.mxu0 %v228
        %1080 = vmatprep.subr.mxu0 %v225
        %1081 = vmatpush1.msra.mxu0 %v224
        %1082 = vmatprep.subr.mxu0 %v221
        %1083 = vmatpush1.msra.mxu0 %v220
        %1084 = vmatprep.subr.mxu0 %v217
        %1085 = vmatpush1.msra.mxu0 %v216
        %1086 = vmatprep.subr.mxu0 %v341
        %1087 = vmatpush2.msra.mxu0 %v340
        %1088 = vmatprep.subr.mxu0 %v337
        %1089 = vmatpush2.msra.mxu0 %v336
        %1090 = vmatprep.subr.mxu0 %v333
        %1091 = vmatpush2.msra.mxu0 %v332
        %1092 = vmatprep.subr.mxu0 %v329
        %1093 = vmatpush2.msra.mxu0 %v328
        %1094 = vmatprep.subr.mxu0 %v325
        %1095 = vmatpush2.msra.mxu0 %v324
        %1096 = vmatprep.subr.mxu0 %v321
        %1097 = vmatpush2.msra.mxu0 %v320
        %1098 = vmatprep.subr.mxu0 %v317
        %1099 = vmatpush2.msra.mxu0 %v316
        %1100 = vmatprep.subr.mxu0 %v313
        %1101 = vmatpush2.msra.mxu0 %v312
        %1102 = vmatprep.subr.mxu0 %v309
        %1103 = vmatpush2.msra.mxu0 %v308
        %1104 = vmatprep.subr.mxu0 %v305
        %1105 = vmatpush2.msra.mxu0 %v304
        %1106 = vmatprep.subr.mxu0 %v301
        %1107 = vmatpush2.msra.mxu0 %v300
        %1108 = vmatprep.subr.mxu0 %v297
        %1109 = vmatpush2.msra.mxu0 %v296
        %1110 = vmatprep.subr.mxu0 %v293
        %1111 = vmatpush2.msra.mxu0 %v292
        %1112 = vmatprep.subr.mxu0 %v289
        %1113 = vmatpush2.msra.mxu0 %v288
        %1114 = vmatprep.subr.mxu0 %v285
        %1115 = vmatpush2.msra.mxu0 %v284
        %1116 = vmatprep.subr.mxu0 %v281
        %1117 = vmatpush2.msra.mxu0 %v280
        %1118 = vmatprep.mubr.f32.mxu0 %v743
        %1119 = vmatmul.mubr.f32.gmra.mxu0 %v735
        %v1120 = vpop.f32.mrf.mxu0
        %v1121 = vadd.f32 0.0, %v1120
        %v1122 = vpop.f32.mrf.mxu0
        %v1123 = vadd.f32 0.0, %v1122
        %1124 = vdwg.mxu0
        %1125 = vmatprep.subr.mxu0 %v405
        %1126 = vmatpush1.msra.mxu0 %v404
        %1127 = vmatprep.subr.mxu0 %v401
        %1128 = vmatpush1.msra.mxu0 %v400
        %1129 = vmatprep.subr.mxu0 %v397
        %1130 = vmatpush1.msra.mxu0 %v396
        %1131 = vmatprep.subr.mxu0 %v393
        %1132 = vmatpush1.msra.mxu0 %v392
        %1133 = vmatprep.subr.mxu0 %v389
        %1134 = vmatpush1.msra.mxu0 %v388
        %1135 = vmatprep.subr.mxu0 %v385
        %1136 = vmatpush1.msra.mxu0 %v384
        %1137 = vmatprep.subr.mxu0 %v381
        %1138 = vmatpush1.msra.mxu0 %v380
        %1139 = vmatprep.subr.mxu0 %v377
        %1140 = vmatpush1.msra.mxu0 %v376
        %1141 = vmatprep.subr.mxu0 %v373
        %1142 = vmatpush1.msra.mxu0 %v372
        %1143 = vmatprep.subr.mxu0 %v369
        %1144 = vmatpush1.msra.mxu0 %v368
        %1145 = vmatprep.subr.mxu0 %v365
        %1146 = vmatpush1.msra.mxu0 %v364
        %1147 = vmatprep.subr.mxu0 %v361
        %1148 = vmatpush1.msra.mxu0 %v360
        %1149 = vmatprep.subr.mxu0 %v357
        %1150 = vmatpush1.msra.mxu0 %v356
        %1151 = vmatprep.subr.mxu0 %v353
        %1152 = vmatpush1.msra.mxu0 %v352
        %1153 = vmatprep.subr.mxu0 %v349
        %1154 = vmatpush1.msra.mxu0 %v348
        %1155 = vmatprep.subr.mxu0 %v345
        %1156 = vmatpush1.msra.mxu0 %v344
        %1157 = vmatprep.subr.mxu0 %v469
        %1158 = vmatpush2.msra.mxu0 %v468
        %1159 = vmatprep.subr.mxu0 %v465
        %1160 = vmatpush2.msra.mxu0 %v464
        %1161 = vmatprep.subr.mxu0 %v461
        %1162 = vmatpush2.msra.mxu0 %v460
        %1163 = vmatprep.subr.mxu0 %v457
        %1164 = vmatpush2.msra.mxu0 %v456
        %1165 = vmatprep.subr.mxu0 %v453
        %1166 = vmatpush2.msra.mxu0 %v452
        %1167 = vmatprep.subr.mxu0 %v449
        %1168 = vmatpush2.msra.mxu0 %v448
        %1169 = vmatprep.subr.mxu0 %v445
        %1170 = vmatpush2.msra.mxu0 %v444
        %1171 = vmatprep.subr.mxu0 %v441
        %1172 = vmatpush2.msra.mxu0 %v440
        %1173 = vmatprep.subr.mxu0 %v437
        %1174 = vmatpush2.msra.mxu0 %v436
        %1175 = vmatprep.subr.mxu0 %v433
        %1176 = vmatpush2.msra.mxu0 %v432
        %1177 = vmatprep.subr.mxu0 %v429
        %1178 = vmatpush2.msra.mxu0 %v428
        %1179 = vmatprep.subr.mxu0 %v425
        %1180 = vmatpush2.msra.mxu0 %v424
        %1181 = vmatprep.subr.mxu0 %v421
        %1182 = vmatpush2.msra.mxu0 %v420
        %1183 = vmatprep.subr.mxu0 %v417
        %1184 = vmatpush2.msra.mxu0 %v416
        %1185 = vmatprep.subr.mxu0 %v413
        %1186 = vmatpush2.msra.mxu0 %v412
        %1187 = vmatprep.subr.mxu0 %v409
        %1188 = vmatpush2.msra.mxu0 %v408
        %1189 = vmatprep.mubr.f32.mxu0 %v744
        %1190 = vmatmul.mubr.f32.gmra.mxu0 %v742
        %v1191 = vpop.f32.mrf.mxu0
        %v1192 = vadd.f32 %v1121, %v1191
        %v1193 = vpop.f32.mrf.mxu0
        %v1194 = vadd.f32 %v1123, %v1193
        %1195 = vdwg.mxu0
        %1196 = vmatprep.subr.mxu0 %v533
        %1197 = vmatpush1.msra.mxu0 %v532
        %1198 = vmatprep.subr.mxu0 %v529
        %1199 = vmatpush1.msra.mxu0 %v528
        %1200 = vmatprep.subr.mxu0 %v525
        %1201 = vmatpush1.msra.mxu0 %v524
        %1202 = vmatprep.subr.mxu0 %v521
        %1203 = vmatpush1.msra.mxu0 %v520
        %1204 = vmatprep.subr.mxu0 %v517
        %1205 = vmatpush1.msra.mxu0 %v516
        %1206 = vmatprep.subr.mxu0 %v513
        %1207 = vmatpush1.msra.mxu0 %v512
        %1208 = vmatprep.subr.mxu0 %v509
        %1209 = vmatpush1.msra.mxu0 %v508
        %1210 = vmatprep.subr.mxu0 %v505
        %1211 = vmatpush1.msra.mxu0 %v504
        %1212 = vmatprep.subr.mxu0 %v501
        %1213 = vmatpush1.msra.mxu0 %v500
        %1214 = vmatprep.subr.mxu0 %v497
        %1215 = vmatpush1.msra.mxu0 %v496
        %1216 = vmatprep.subr.mxu0 %v493
        %1217 = vmatpush1.msra.mxu0 %v492
        %1218 = vmatprep.subr.mxu0 %v489
        %1219 = vmatpush1.msra.mxu0 %v488
        %1220 = vmatprep.subr.mxu0 %v485
        %1221 = vmatpush1.msra.mxu0 %v484
        %1222 = vmatprep.subr.mxu0 %v481
        %1223 = vmatpush1.msra.mxu0 %v480
        %1224 = vmatprep.subr.mxu0 %v477
        %1225 = vmatpush1.msra.mxu0 %v476
        %1226 = vmatprep.subr.mxu0 %v473
        %1227 = vmatpush1.msra.mxu0 %v472
        %1228 = vmatprep.subr.mxu0 %v597
        %1229 = vmatpush2.msra.mxu0 %v596
        %1230 = vmatprep.subr.mxu0 %v593
        %1231 = vmatpush2.msra.mxu0 %v592
        %1232 = vmatprep.subr.mxu0 %v589
        %1233 = vmatpush2.msra.mxu0 %v588
        %1234 = vmatprep.subr.mxu0 %v585
        %1235 = vmatpush2.msra.mxu0 %v584
        %1236 = vmatprep.subr.mxu0 %v581
        %1237 = vmatpush2.msra.mxu0 %v580
        %1238 = vmatprep.subr.mxu0 %v577
        %1239 = vmatpush2.msra.mxu0 %v576
        %1240 = vmatprep.subr.mxu0 %v573
        %1241 = vmatpush2.msra.mxu0 %v572
        %1242 = vmatprep.subr.mxu0 %v569
        %1243 = vmatpush2.msra.mxu0 %v568
        %1244 = vmatprep.subr.mxu0 %v565
        %1245 = vmatpush2.msra.mxu0 %v564
        %1246 = vmatprep.subr.mxu0 %v561
        %1247 = vmatpush2.msra.mxu0 %v560
        %1248 = vmatprep.subr.mxu0 %v557
        %1249 = vmatpush2.msra.mxu0 %v556
        %1250 = vmatprep.subr.mxu0 %v553
        %1251 = vmatpush2.msra.mxu0 %v552
        %1252 = vmatprep.subr.mxu0 %v549
        %1253 = vmatpush2.msra.mxu0 %v548
        %1254 = vmatprep.subr.mxu0 %v545
        %1255 = vmatpush2.msra.mxu0 %v544
        %1256 = vmatprep.subr.mxu0 %v541
        %1257 = vmatpush2.msra.mxu0 %v540
        %1258 = vmatprep.subr.mxu0 %v537
        %1259 = vmatpush2.msra.mxu0 %v536
        %1260 = vmatprep.mubr.f32.mxu0 %v760
        %1261 = vmatmul.mubr.f32.gmra.mxu0 %v752
        %v1262 = vpop.f32.mrf.mxu0
        %v1263 = vadd.f32 %v1192, %v1262
        %v1264 = vpop.f32.mrf.mxu0
        %v1265 = vadd.f32 %v1194, %v1264
        %1266 = vdwg.mxu0
        %1267 = vmatprep.subr.mxu0 %v661
        %1268 = vmatpush1.msra.mxu0 %v660
        %1269 = vmatprep.subr.mxu0 %v657
        %1270 = vmatpush1.msra.mxu0 %v656
        %1271 = vmatprep.subr.mxu0 %v653
        %1272 = vmatpush1.msra.mxu0 %v652
        %1273 = vmatprep.subr.mxu0 %v649
        %1274 = vmatpush1.msra.mxu0 %v648
        %1275 = vmatprep.subr.mxu0 %v645
        %1276 = vmatpush1.msra.mxu0 %v644
        %1277 = vmatprep.subr.mxu0 %v641
        %1278 = vmatpush1.msra.mxu0 %v640
        %1279 = vmatprep.subr.mxu0 %v637
        %1280 = vmatpush1.msra.mxu0 %v636
        %1281 = vmatprep.subr.mxu0 %v633
        %1282 = vmatpush1.msra.mxu0 %v632
        %1283 = vmatprep.subr.mxu0 %v629
        %1284 = vmatpush1.msra.mxu0 %v628
        %1285 = vmatprep.subr.mxu0 %v625
        %1286 = vmatpush1.msra.mxu0 %v624
        %1287 = vmatprep.subr.mxu0 %v621
        %1288 = vmatpush1.msra.mxu0 %v620
        %1289 = vmatprep.subr.mxu0 %v617
        %1290 = vmatpush1.msra.mxu0 %v616
        %1291 = vmatprep.subr.mxu0 %v613
        %1292 = vmatpush1.msra.mxu0 %v612
        %1293 = vmatprep.subr.mxu0 %v609
        %1294 = vmatpush1.msra.mxu0 %v608
        %1295 = vmatprep.subr.mxu0 %v605
        %1296 = vmatpush1.msra.mxu0 %v604
        %1297 = vmatprep.subr.mxu0 %v601
        %1298 = vmatpush1.msra.mxu0 %v600
        %1299 = vmatprep.subr.mxu0 %v725
        %1300 = vmatpush2.msra.mxu0 %v724
        %1301 = vmatprep.subr.mxu0 %v721
        %1302 = vmatpush2.msra.mxu0 %v720
        %1303 = vmatprep.subr.mxu0 %v717
        %1304 = vmatpush2.msra.mxu0 %v716
        %1305 = vmatprep.subr.mxu0 %v713
        %1306 = vmatpush2.msra.mxu0 %v712
        %1307 = vmatprep.subr.mxu0 %v709
        %1308 = vmatpush2.msra.mxu0 %v708
        %1309 = vmatprep.subr.mxu0 %v705
        %1310 = vmatpush2.msra.mxu0 %v704
        %1311 = vmatprep.subr.mxu0 %v701
        %1312 = vmatpush2.msra.mxu0 %v700
        %1313 = vmatprep.subr.mxu0 %v697
        %1314 = vmatpush2.msra.mxu0 %v696
        %1315 = vmatprep.subr.mxu0 %v693
        %1316 = vmatpush2.msra.mxu0 %v692
        %1317 = vmatprep.subr.mxu0 %v689
        %1318 = vmatpush2.msra.mxu0 %v688
        %1319 = vmatprep.subr.mxu0 %v685
        %1320 = vmatpush2.msra.mxu0 %v684
        %1321 = vmatprep.subr.mxu0 %v681
        %1322 = vmatpush2.msra.mxu0 %v680
        %1323 = vmatprep.subr.mxu0 %v677
        %1324 = vmatpush2.msra.mxu0 %v676
        %1325 = vmatprep.subr.mxu0 %v673
        %1326 = vmatpush2.msra.mxu0 %v672
        %1327 = vmatprep.subr.mxu0 %v669
        %1328 = vmatpush2.msra.mxu0 %v668
        %1329 = vmatprep.subr.mxu0 %v665
        %1330 = vmatpush2.msra.mxu0 %v664
        %1331 = vmatprep.mubr.f32.mxu0 %v761
        %1332 = vmatmul.mubr.f32.gmra.mxu0 %v759
        %v1333 = vpop.f32.mrf.mxu0
        %v1334 = vadd.f32 %v1263, %v1333
        %v1335 = vpop.f32.mrf.mxu0
        %v1336 = vadd.f32 %v1265, %v1335
        %1337 = vdwg.mxu0
        %v1342 = vcombine.low %v1050, %v1052
        %v1343 = vcombine.low %v1334, %v1336
        %v1345 = vunpack.c.l.s4 1983009808
        %v1346 = vunpack.c.0.s8 %v1345
        %v1347 = vlaneseq
        %v1348 = vshrl.u32 %v1347, 7
        %v1349 = vsub.s32 %v1346, %v1348
        %v1350 = vrot.slane %v1342, %v1349
        %v1352 = vunpack.c.l.s4 1983009808
        %v1353 = vunpack.c.0.s8 %v1352
        %v1354 = vlaneseq
        %v1355 = vshrl.u32 %v1354, 7
        %v1356 = vsub.s32 %v1353, %v1355
        %v1357 = vrot.slane %v1343, %v1356
        %v1358 = vcombine.low %v1350, %v1357
        %v1360 = vadd.f32 %v211, %v1358
        %1361 = vst [vmem:[#allocation2] sm:$0xff] %v1360
        // Predicated region
        $region37: #{stitch_forward.1} parent=27 // pred_check
          %p1362 = pneg %p206
        $region38: #{stitch_forward.1} parent=27 // pred_check_branch
          %1364 = sbr.rel (%p1362) target = $region40
        $region39: #{stitch_forward.1} parent=27 // pred_region
          %v1365 = vld [vmem:[#allocation2] sm:$0xff]
          %1366 = vst [vmem:[%s204] sm:$0xff] %v1365
        $region40: #{stitch_forward.1} parent=27 // pred_fallthru
          _
        %s1367 = smul.u32 4, %s20
        %p1368 = scmp.lt.s32.totalorder %s1367, 7
        %s1369 = scalar_select %p1368, %s1367, 7
        %s1370 = smul.addr %s1369, 2
        %s1371 = scalar_lea.vmem %s2, %s1370
        // Predicated region
        $region41: #{stitch_forward.1} parent=27 // pred_check
          %p1372 = pneg %p100
        $region42: #{stitch_forward.1} parent=27 // pred_check_branch
          %1374 = sbr.rel (%p1372) target = $region44
        $region43: #{stitch_forward.1} parent=27 // pred_region
          %s1375 = smul.u32 4, %s20
        $region44: #{stitch_forward.1} parent=27 // pred_fallthru
          _
      $region28: #{stitch_forward.1} parent=5 // pred_fallthru
        _
      %p1376 = scmp.le.s32.totalorder 2, %s11
      // Predicated region
      $region45: #{stitch_forward.1} parent=5 // pred_check
        %p1377 = pneg %p1376
      $region46: #{stitch_forward.1} parent=5 // pred_check_branch
        %1379 = sbr.rel (%p1377) target = $region48
      $region47: #{stitch_forward.1} parent=5 // pred_region
        %s1380 = ssub.s32 %s11, 2
        // Predicated region
        $region49: #{stitch_forward.1} parent=47 // pred_check
          %p1381 = pneg %p106
        $region50: #{stitch_forward.1} parent=47 // pred_check_branch
          %1383 = sbr.rel (%p1381) target = $region52
        $region51: #{stitch_forward.1} parent=47 // pred_region
          %s1384 = smul.u32 4, %s22
          %p1385 = scmp.lt.s32.totalorder %s1384, 7
          %s1386 = scalar_select %p1385, %s1384, 7
          %s1387 = smul.addr %s1386, 2
          %s1388 = scalar_lea.vmem %s2, %s1387
        $region52: #{stitch_forward.1} parent=47 // pred_fallthru
          _
      $region48: #{stitch_forward.1} parent=5 // pred_fallthru
        _
    $region6: #{stitch_forward.1} parent=1 // loop_footer
      %s15 = sadd.s32 1, %s11
    $region7: #{stitch_forward.1} parent=1 // loop_footer_branch
      %10 = sbr.rel target = $region3
    $region8: #{stitch_forward.1} parent=1 // loop_exit
      _
    %1389 = vsyncpa [#allocation4], 1
    %s1390 = scalar_lea.sflag [#allocation4], 1
    %1391 = vsyncpa %s1390, 1

</llo_original>
